<compile_context>
chip_gen: v7x
topology: tpu7x:2x2x1
jax: 0.10.0
libtpu: 0.0.40
codegen_flags: <defaults>
</compile_context>

<pallas_src>
import math

import jax
import jax.numpy as jnp
from jax.experimental import pallas as pl
from jax.experimental.pallas import tpu as pltpu

DIM = 32          # embed dim (C)
HEADS = 4
MLP_DIM = 64
HEAD_DIM = DIM // HEADS
LN_EPS = 1e-5

# ---- packed weight-slab row layout (8-row aligned, lane offset 0) -----------
R_WQKV = 0                       # (DIM, 3*DIM)    rows   0..31, lanes 0..95
R_WOUT = R_WQKV + DIM            # (DIM, DIM)      rows  32..63, lanes 0..31
R_W1 = R_WOUT + DIM              # (DIM, MLP_DIM)  rows  64..95, lanes 0..63
R_W2 = R_W1 + DIM                # (MLP_DIM, DIM)  rows  96..159, lanes 0..31
R_VECS = R_W2 + MLP_DIM          # 8 rows of biases / LN params: rows 160..167
SLAB_ROWS = R_VECS + 8           # 168
SLAB_COLS = 128


def pack_params(p):
    """Pack every weight / bias / LN param into one lane-dense (168,128) slab."""
    slab = jnp.zeros((SLAB_ROWS, SLAB_COLS), jnp.float32)
    slab = slab.at[R_WQKV:R_WQKV + DIM, 0:3 * DIM].set(p["w_in"].T)     # (32, 96)
    slab = slab.at[R_WOUT:R_WOUT + DIM, 0:DIM].set(p["w_out"].T)        # (32, 32)
    slab = slab.at[R_W1:R_W1 + DIM, 0:MLP_DIM].set(p["w1"].T)           # (32, 64)
    slab = slab.at[R_W2:R_W2 + MLP_DIM, 0:DIM].set(p["w2"].T)           # (64, 32)
    slab = slab.at[R_VECS + 0, 0:3 * DIM].set(p["b_in"])
    slab = slab.at[R_VECS + 1, 0:DIM].set(p["b_out"])
    slab = slab.at[R_VECS + 2, 0:DIM].set(p["ln1_w"])
    slab = slab.at[R_VECS + 3, 0:DIM].set(p["ln1_b"])
    slab = slab.at[R_VECS + 4, 0:MLP_DIM].set(p["b1"])
    slab = slab.at[R_VECS + 5, 0:DIM].set(p["b2"])
    slab = slab.at[R_VECS + 6, 0:DIM].set(p["ln2_w"])
    slab = slab.at[R_VECS + 7, 0:DIM].set(p["ln2_b"])
    return slab


def _transformer_block_kernel(x_ref, w_ref, o_ref):
    # x_ref: (S, C) tokens of one batch element; w_ref: (168, 128) packed slab.
    x = x_ref[...]                                                    # (S, C)

    # ---- carve operands out of the packed slab (static slices) ----
    w_qkv = w_ref[R_WQKV:R_WQKV + DIM, 0:3 * DIM]                     # (32, 96)
    w_out = w_ref[R_WOUT:R_WOUT + DIM, 0:DIM]                         # (32, 32)
    w1 = w_ref[R_W1:R_W1 + DIM, 0:MLP_DIM]                            # (32, 64)
    w2 = w_ref[R_W2:R_W2 + MLP_DIM, 0:DIM]                            # (64, 32)
    b_qkv = w_ref[R_VECS + 0:R_VECS + 1, 0:3 * DIM]                   # (1, 96)
    b_out = w_ref[R_VECS + 1:R_VECS + 2, 0:DIM]                       # (1, 32)
    ln1w = w_ref[R_VECS + 2:R_VECS + 3, 0:DIM]
    ln1b = w_ref[R_VECS + 3:R_VECS + 4, 0:DIM]
    b1 = w_ref[R_VECS + 4:R_VECS + 5, 0:MLP_DIM]
    b2 = w_ref[R_VECS + 5:R_VECS + 6, 0:DIM]
    ln2w = w_ref[R_VECS + 6:R_VECS + 7, 0:DIM]
    ln2b = w_ref[R_VECS + 7:R_VECS + 8, 0:DIM]

    scale = 1.0 / math.sqrt(HEAD_DIM)

    # ---- fused QKV projection: one (S,32)x(32,96) matmul ----
    qkv = jnp.dot(x, w_qkv, preferred_element_type=jnp.float32) + b_qkv   # (S, 96)

    # ---- per-head attention (static unroll), heads re-packed into lanes ----
    ctx_heads = []
    for h in range(HEADS):
        lo = h * HEAD_DIM
        qh = qkv[:, lo:lo + HEAD_DIM]                                 # (S, HD)
        kh = qkv[:, DIM + lo:DIM + lo + HEAD_DIM]                     # (S, HD)
        vh = qkv[:, 2 * DIM + lo:2 * DIM + lo + HEAD_DIM]             # (S, HD)
        # scores: contract the head dims directly (no in-kernel transpose)
        s = jax.lax.dot_general(qh * scale, kh,
                                (((1,), (1,)), ((), ())),
                                preferred_element_type=jnp.float32)   # (S, S)
        s = s - jnp.max(s, axis=-1, keepdims=True)
        p = jnp.exp(s)
        p = p / jnp.sum(p, axis=-1, keepdims=True)
        ctx_heads.append(jnp.dot(p, vh, preferred_element_type=jnp.float32))
    ctx = jnp.concatenate(ctx_heads, axis=-1)                         # (S, C)

    # single full-width (32,32) output projection
    attn = jnp.dot(ctx, w_out, preferred_element_type=jnp.float32) + b_out

    # ---- residual + LayerNorm 1 ----
    h1 = attn + x
    mu1 = jnp.mean(h1, axis=-1, keepdims=True)
    var1 = jnp.mean(jnp.square(h1 - mu1), axis=-1, keepdims=True)
    h1n = (h1 - mu1) * jax.lax.rsqrt(var1 + LN_EPS) * ln1w + ln1b

    # ---- MLP: Linear -> GELU(exact erf) -> Linear ----
    # TODO(synk): nn.Dropout layers are treated as identity (eval/inference mode).
    m = jnp.dot(h1n, w1, preferred_element_type=jnp.float32) + b1
    m = 0.5 * m * (1.0 + jax.lax.erf(m * (1.0 / math.sqrt(2.0))))
    m = jnp.dot(m, w2, preferred_element_type=jnp.float32) + b2

    # ---- residual + LayerNorm 2 ----
    h2 = m + h1n
    mu2 = jnp.mean(h2, axis=-1, keepdims=True)
    var2 = jnp.mean(jnp.square(h2 - mu2), axis=-1, keepdims=True)
    o_ref[...] = (h2 - mu2) * jax.lax.rsqrt(var2 + LN_EPS) * ln2w + ln2b


@jax.jit
def transformer_block(x_sbc, slab):
    """x_sbc: (S, B, C) float32 -> (S, B, C) float32 (matches the PyTorch module)."""
    S, B, C = x_sbc.shape
    assert C == DIM and DIM % HEADS == 0

    # One tiny host-side relayout (amortized under jit): per-batch attention is
    # then a plain grid axis -> no block-diagonal mask, no wasted score work.
    x_bsc = jnp.transpose(x_sbc, (1, 0, 2))                           # (B, S, C)

    out_bsc = pl.pallas_call(
        _transformer_block_kernel,
        out_shape=jax.ShapeDtypeStruct((B, S, C), jnp.float32),
        grid=(B,),
        in_specs=[
            pl.BlockSpec((None, S, C), lambda b: (b, 0, 0)),          # this batch's tokens
            pl.BlockSpec((SLAB_ROWS, SLAB_COLS), lambda b: (0, 0)),   # slab: resident, 1 DMA
        ],
        out_specs=pl.BlockSpec((None, S, C), lambda b: (b, 0, 0)),
        compiler_params=pltpu.CompilerParams(
            dimension_semantics=("parallel",)),                       # 2nd TC on v7x
    )(x_bsc, slab)

    return jnp.transpose(out_bsc, (1, 0, 2))


def reference_jax(x_sbc, p):
    """Pure-JAX reference (same math as nn.MultiheadAttention -> LN -> MLP -> LN)."""
    x = jnp.transpose(x_sbc, (1, 0, 2))  # (B, S, C)
    B, S, C = x.shape
    qkv = x @ p["w_in"].T + p["b_in"]
    q, k, v = jnp.split(qkv, 3, axis=-1)

    def split_heads(t):
        return t.reshape(B, S, HEADS, HEAD_DIM).transpose(0, 2, 1, 3)

    qh, kh, vh = split_heads(q), split_heads(k), split_heads(v)
    s = jnp.einsum("bhqd,bhkd->bhqk", qh, kh) / math.sqrt(HEAD_DIM)
    pr = jax.nn.softmax(s, axis=-1)
    a = jnp.einsum("bhqk,bhkd->bhqd", pr, vh).transpose(0, 2, 1, 3).reshape(B, S, C)
    a = a @ p["w_out"].T + p["b_out"]

    def ln(t, w, b):
        mu = t.mean(-1, keepdims=True)
        var = ((t - mu) ** 2).mean(-1, keepdims=True)
        return (t - mu) / jnp.sqrt(var + LN_EPS) * w + b

    h1 = ln(a + x, p["ln1_w"], p["ln1_b"])
    m = h1 @ p["w1"].T + p["b1"]
    m = jax.nn.gelu(m, approximate=False)
    m = m @ p["w2"].T + p["b2"]
    h2 = ln(m + h1, p["ln2_w"], p["ln2_b"])
    return jnp.transpose(h2, (1, 0, 2))


def init_params(key):
    ks = jax.random.split(key, 8)
    scale = 0.05
    return {
        "w_in": scale * jax.random.normal(ks[0], (3 * DIM, DIM), jnp.float32),
        "b_in": scale * jax.random.normal(ks[1], (3 * DIM,), jnp.float32),
        "w_out": scale * jax.random.normal(ks[2], (DIM, DIM), jnp.float32),
        "b_out": scale * jax.random.normal(ks[3], (DIM,), jnp.float32),
        "ln1_w": jnp.ones((DIM,), jnp.float32),
        "ln1_b": jnp.zeros((DIM,), jnp.float32),
        "w1": scale * jax.random.normal(ks[4], (MLP_DIM, DIM), jnp.float32),
        "b1": scale * jax.random.normal(ks[5], (MLP_DIM,), jnp.float32),
        "w2": scale * jax.random.normal(ks[6], (DIM, MLP_DIM), jnp.float32),
        "b2": scale * jax.random.normal(ks[7], (DIM,), jnp.float32),
        "ln2_w": jnp.ones((DIM,), jnp.float32),
        "ln2_b": jnp.zeros((DIM,), jnp.float32),
    }


if __name__ == "__main__":
    key = jax.random.PRNGKey(0)
    k_x, k_p = jax.random.split(key)

    S, B, C = 8, 2, DIM  # (seq, batch, channels) as in the PyTorch forward
    x = jax.random.normal(k_x, (S, B, C), jnp.float32)
    params = init_params(k_p)

    slab = pack_params(params)        # one-time host-side packing (1 lane-dense operand)
    out = transformer_block(x, slab)
    out = jax.block_until_ready(out)

    ref = reference_jax(x, params)
    assert out.shape == (S, B, C)
    assert jnp.allclose(out, ref, atol=1e-4, rtol=1e-4), "mismatch vs JAX reference"

    print("KERNEL_OK")
</pallas_src>

<mosaic_0001>
module attributes {stable_mosaic.version = 11 : i64} {
  func.func @_transformer_block_kernel(%arg0: i32, %arg1: memref<1x8x32xf32, #tpu.memory_space<vmem>>, %arg2: memref<168x128xf32, #tpu.memory_space<vmem>>, %arg3: memref<1x8x32xf32, #tpu.memory_space<vmem>>) attributes {dimension_semantics = [#tpu.dimension_semantics<parallel>], iteration_bounds = array<i64: 2>, scalar_prefetch = 0 : i64, scratch_operands = 0 : i64, tpu.core_type = #tpu.core_type<tc>, window_params = [{transform_indices = @transform_0, window_bounds = array<i64: 1, 8, 32>}, {pipeline_mode = #tpu.pipeline_mode<synchronous>, transform_indices = @transform_1, window_bounds = array<i64: 168, 128>}, {transform_indices = @transform_2, window_bounds = array<i64: 1, 8, 32>}]} {
    %c0 = arith.constant 0 : index
    %c0_0 = arith.constant 0 : index
    %c0_1 = arith.constant 0 : index
    %0 = vector.load %arg1[%c0, %c0_0, %c0_1] : memref<1x8x32xf32, #tpu.memory_space<vmem>>, vector<1x8x32xf32>
    %1 = vector.shape_cast %0 : vector<1x8x32xf32> to vector<8x32xf32>
    %c0_2 = arith.constant 0 : index
    %c0_3 = arith.constant 0 : index
    %2 = vector.load %arg2[%c0_2, %c0_3] : memref<168x128xf32, #tpu.memory_space<vmem>>, vector<32x96xf32>
    %c32 = arith.constant 32 : index
    %c0_4 = arith.constant 0 : index
    %3 = vector.load %arg2[%c32, %c0_4] : memref<168x128xf32, #tpu.memory_space<vmem>>, vector<32x32xf32>
    %c64 = arith.constant 64 : index
    %c0_5 = arith.constant 0 : index
    %4 = vector.load %arg2[%c64, %c0_5] : memref<168x128xf32, #tpu.memory_space<vmem>>, vector<32x64xf32>
    %c96 = arith.constant 96 : index
    %c0_6 = arith.constant 0 : index
    %5 = vector.load %arg2[%c96, %c0_6] : memref<168x128xf32, #tpu.memory_space<vmem>>, vector<64x32xf32>
    %c160 = arith.constant 160 : index
    %c0_7 = arith.constant 0 : index
    %6 = vector.load %arg2[%c160, %c0_7] : memref<168x128xf32, #tpu.memory_space<vmem>>, vector<1x96xf32>
    %c161 = arith.constant 161 : index
    %c0_8 = arith.constant 0 : index
    %7 = vector.load %arg2[%c161, %c0_8] : memref<168x128xf32, #tpu.memory_space<vmem>>, vector<1x32xf32>
    %c162 = arith.constant 162 : index
    %c0_9 = arith.constant 0 : index
    %8 = vector.load %arg2[%c162, %c0_9] : memref<168x128xf32, #tpu.memory_space<vmem>>, vector<1x32xf32>
    %c163 = arith.constant 163 : index
    %c0_10 = arith.constant 0 : index
    %9 = vector.load %arg2[%c163, %c0_10] : memref<168x128xf32, #tpu.memory_space<vmem>>, vector<1x32xf32>
    %c164 = arith.constant 164 : index
    %c0_11 = arith.constant 0 : index
    %10 = vector.load %arg2[%c164, %c0_11] : memref<168x128xf32, #tpu.memory_space<vmem>>, vector<1x64xf32>
    %c165 = arith.constant 165 : index
    %c0_12 = arith.constant 0 : index
    %11 = vector.load %arg2[%c165, %c0_12] : memref<168x128xf32, #tpu.memory_space<vmem>>, vector<1x32xf32>
    %c166 = arith.constant 166 : index
    %c0_13 = arith.constant 0 : index
    %12 = vector.load %arg2[%c166, %c0_13] : memref<168x128xf32, #tpu.memory_space<vmem>>, vector<1x32xf32>
    %c167 = arith.constant 167 : index
    %c0_14 = arith.constant 0 : index
    %13 = vector.load %arg2[%c167, %c0_14] : memref<168x128xf32, #tpu.memory_space<vmem>>, vector<1x32xf32>
    %cst = arith.constant dense<0.000000e+00> : vector<8x96xf32>
    %14 = tpu.matmul %1, %2, %cst {dimension_numbers = #tpu.dot_dimension_numbers<[1], [0], [0], [1], [0, 0, 1, 1], [], []>} : vector<8x32xf32>, vector<32x96xf32>, vector<8x96xf32> -> vector<8x96xf32>
    %15 = vector.broadcast %6 : vector<1x96xf32> to vector<8x96xf32>
    %16 = arith.addf %14, %15 : vector<8x96xf32>
    %17 = vector.extract_strided_slice %16 {offsets = [0, 0], sizes = [8, 8], strides = [1, 1]} : vector<8x96xf32> to vector<8x8xf32>
    %18 = vector.extract_strided_slice %16 {offsets = [0, 32], sizes = [8, 8], strides = [1, 1]} : vector<8x96xf32> to vector<8x8xf32>
    %19 = vector.extract_strided_slice %16 {offsets = [0, 64], sizes = [8, 8], strides = [1, 1]} : vector<8x96xf32> to vector<8x8xf32>
    %cst_15 = arith.constant 0.353553385 : f32
    %20 = vector.broadcast %cst_15 : f32 to vector<8x8xf32>
    %21 = arith.mulf %17, %20 : vector<8x8xf32>
    %cst_16 = arith.constant dense<0.000000e+00> : vector<8x8xf32>
    %22 = tpu.matmul %21, %18, %cst_16 {dimension_numbers = #tpu.dot_dimension_numbers<[1], [1], [0], [0], [0, 0, 1, 0], [], []>} : vector<8x8xf32>, vector<8x8xf32>, vector<8x8xf32> -> vector<8x8xf32>
    %cst_17 = arith.constant dense<0xFF800000> : vector<8xf32>
    %23 = vector.multi_reduction <maximumf>, %22, %cst_17 [1] : vector<8x8xf32> to vector<8xf32>
    %24 = vector.shape_cast %23 : vector<8xf32> to vector<8x1xf32>
    %25 = vector.broadcast %24 : vector<8x1xf32> to vector<8x8xf32>
    %26 = arith.subf %22, %25 : vector<8x8xf32>
    %27 = math.exp %26 : vector<8x8xf32>
    %cst_18 = arith.constant dense<0.000000e+00> : vector<8xf32>
    %28 = vector.multi_reduction <add>, %27, %cst_18 [1] : vector<8x8xf32> to vector<8xf32>
    %29 = vector.shape_cast %28 : vector<8xf32> to vector<8x1xf32>
    %30 = vector.broadcast %29 : vector<8x1xf32> to vector<8x8xf32>
    %31 = arith.divf %27, %30 : vector<8x8xf32>
    %cst_19 = arith.constant dense<0.000000e+00> : vector<8x8xf32>
    %32 = tpu.matmul %31, %19, %cst_19 {dimension_numbers = #tpu.dot_dimension_numbers<[1], [0], [0], [1], [0, 0, 1, 1], [], []>} : vector<8x8xf32>, vector<8x8xf32>, vector<8x8xf32> -> vector<8x8xf32>
    %33 = vector.extract_strided_slice %16 {offsets = [0, 8], sizes = [8, 8], strides = [1, 1]} : vector<8x96xf32> to vector<8x8xf32>
    %34 = vector.extract_strided_slice %16 {offsets = [0, 40], sizes = [8, 8], strides = [1, 1]} : vector<8x96xf32> to vector<8x8xf32>
    %35 = vector.extract_strided_slice %16 {offsets = [0, 72], sizes = [8, 8], strides = [1, 1]} : vector<8x96xf32> to vector<8x8xf32>
    %cst_20 = arith.constant 0.353553385 : f32
    %36 = vector.broadcast %cst_20 : f32 to vector<8x8xf32>
    %37 = arith.mulf %33, %36 : vector<8x8xf32>
    %cst_21 = arith.constant dense<0.000000e+00> : vector<8x8xf32>
    %38 = tpu.matmul %37, %34, %cst_21 {dimension_numbers = #tpu.dot_dimension_numbers<[1], [1], [0], [0], [0, 0, 1, 0], [], []>} : vector<8x8xf32>, vector<8x8xf32>, vector<8x8xf32> -> vector<8x8xf32>
    %cst_22 = arith.constant dense<0xFF800000> : vector<8xf32>
    %39 = vector.multi_reduction <maximumf>, %38, %cst_22 [1] : vector<8x8xf32> to vector<8xf32>
    %40 = vector.shape_cast %39 : vector<8xf32> to vector<8x1xf32>
    %41 = vector.broadcast %40 : vector<8x1xf32> to vector<8x8xf32>
    %42 = arith.subf %38, %41 : vector<8x8xf32>
    %43 = math.exp %42 : vector<8x8xf32>
    %cst_23 = arith.constant dense<0.000000e+00> : vector<8xf32>
    %44 = vector.multi_reduction <add>, %43, %cst_23 [1] : vector<8x8xf32> to vector<8xf32>
    %45 = vector.shape_cast %44 : vector<8xf32> to vector<8x1xf32>
    %46 = vector.broadcast %45 : vector<8x1xf32> to vector<8x8xf32>
    %47 = arith.divf %43, %46 : vector<8x8xf32>
    %cst_24 = arith.constant dense<0.000000e+00> : vector<8x8xf32>
    %48 = tpu.matmul %47, %35, %cst_24 {dimension_numbers = #tpu.dot_dimension_numbers<[1], [0], [0], [1], [0, 0, 1, 1], [], []>} : vector<8x8xf32>, vector<8x8xf32>, vector<8x8xf32> -> vector<8x8xf32>
    %49 = vector.extract_strided_slice %16 {offsets = [0, 16], sizes = [8, 8], strides = [1, 1]} : vector<8x96xf32> to vector<8x8xf32>
    %50 = vector.extract_strided_slice %16 {offsets = [0, 48], sizes = [8, 8], strides = [1, 1]} : vector<8x96xf32> to vector<8x8xf32>
    %51 = vector.extract_strided_slice %16 {offsets = [0, 80], sizes = [8, 8], strides = [1, 1]} : vector<8x96xf32> to vector<8x8xf32>
    %cst_25 = arith.constant 0.353553385 : f32
    %52 = vector.broadcast %cst_25 : f32 to vector<8x8xf32>
    %53 = arith.mulf %49, %52 : vector<8x8xf32>
    %cst_26 = arith.constant dense<0.000000e+00> : vector<8x8xf32>
    %54 = tpu.matmul %53, %50, %cst_26 {dimension_numbers = #tpu.dot_dimension_numbers<[1], [1], [0], [0], [0, 0, 1, 0], [], []>} : vector<8x8xf32>, vector<8x8xf32>, vector<8x8xf32> -> vector<8x8xf32>
    %cst_27 = arith.constant dense<0xFF800000> : vector<8xf32>
    %55 = vector.multi_reduction <maximumf>, %54, %cst_27 [1] : vector<8x8xf32> to vector<8xf32>
    %56 = vector.shape_cast %55 : vector<8xf32> to vector<8x1xf32>
    %57 = vector.broadcast %56 : vector<8x1xf32> to vector<8x8xf32>
    %58 = arith.subf %54, %57 : vector<8x8xf32>
    %59 = math.exp %58 : vector<8x8xf32>
    %cst_28 = arith.constant dense<0.000000e+00> : vector<8xf32>
    %60 = vector.multi_reduction <add>, %59, %cst_28 [1] : vector<8x8xf32> to vector<8xf32>
    %61 = vector.shape_cast %60 : vector<8xf32> to vector<8x1xf32>
    %62 = vector.broadcast %61 : vector<8x1xf32> to vector<8x8xf32>
    %63 = arith.divf %59, %62 : vector<8x8xf32>
    %cst_29 = arith.constant dense<0.000000e+00> : vector<8x8xf32>
    %64 = tpu.matmul %63, %51, %cst_29 {dimension_numbers = #tpu.dot_dimension_numbers<[1], [0], [0], [1], [0, 0, 1, 1], [], []>} : vector<8x8xf32>, vector<8x8xf32>, vector<8x8xf32> -> vector<8x8xf32>
    %65 = vector.extract_strided_slice %16 {offsets = [0, 24], sizes = [8, 8], strides = [1, 1]} : vector<8x96xf32> to vector<8x8xf32>
    %66 = vector.extract_strided_slice %16 {offsets = [0, 56], sizes = [8, 8], strides = [1, 1]} : vector<8x96xf32> to vector<8x8xf32>
    %67 = vector.extract_strided_slice %16 {offsets = [0, 88], sizes = [8, 8], strides = [1, 1]} : vector<8x96xf32> to vector<8x8xf32>
    %cst_30 = arith.constant 0.353553385 : f32
    %68 = vector.broadcast %cst_30 : f32 to vector<8x8xf32>
    %69 = arith.mulf %65, %68 : vector<8x8xf32>
    %cst_31 = arith.constant dense<0.000000e+00> : vector<8x8xf32>
    %70 = tpu.matmul %69, %66, %cst_31 {dimension_numbers = #tpu.dot_dimension_numbers<[1], [1], [0], [0], [0, 0, 1, 0], [], []>} : vector<8x8xf32>, vector<8x8xf32>, vector<8x8xf32> -> vector<8x8xf32>
    %cst_32 = arith.constant dense<0xFF800000> : vector<8xf32>
    %71 = vector.multi_reduction <maximumf>, %70, %cst_32 [1] : vector<8x8xf32> to vector<8xf32>
    %72 = vector.shape_cast %71 : vector<8xf32> to vector<8x1xf32>
    %73 = vector.broadcast %72 : vector<8x1xf32> to vector<8x8xf32>
    %74 = arith.subf %70, %73 : vector<8x8xf32>
    %75 = math.exp %74 : vector<8x8xf32>
    %cst_33 = arith.constant dense<0.000000e+00> : vector<8xf32>
    %76 = vector.multi_reduction <add>, %75, %cst_33 [1] : vector<8x8xf32> to vector<8xf32>
    %77 = vector.shape_cast %76 : vector<8xf32> to vector<8x1xf32>
    %78 = vector.broadcast %77 : vector<8x1xf32> to vector<8x8xf32>
    %79 = arith.divf %75, %78 : vector<8x8xf32>
    %cst_34 = arith.constant dense<0.000000e+00> : vector<8x8xf32>
    %80 = tpu.matmul %79, %67, %cst_34 {dimension_numbers = #tpu.dot_dimension_numbers<[1], [0], [0], [1], [0, 0, 1, 1], [], []>} : vector<8x8xf32>, vector<8x8xf32>, vector<8x8xf32> -> vector<8x8xf32>
    %81 = tpu.concatenate %32, %48, %64, %80 in 1 : vector<8x8xf32>, vector<8x8xf32>, vector<8x8xf32>, vector<8x8xf32> -> vector<8x32xf32>
    %cst_35 = arith.constant dense<0.000000e+00> : vector<8x32xf32>
    %82 = tpu.matmul %81, %3, %cst_35 {dimension_numbers = #tpu.dot_dimension_numbers<[1], [0], [0], [1], [0, 0, 1, 1], [], []>} : vector<8x32xf32>, vector<32x32xf32>, vector<8x32xf32> -> vector<8x32xf32>
    %83 = vector.broadcast %7 : vector<1x32xf32> to vector<8x32xf32>
    %84 = arith.addf %82, %83 : vector<8x32xf32>
    %85 = arith.addf %84, %1 : vector<8x32xf32>
    %cst_36 = arith.constant dense<0.000000e+00> : vector<8xf32>
    %86 = vector.multi_reduction <add>, %85, %cst_36 [1] : vector<8x32xf32> to vector<8xf32>
    %87 = vector.shape_cast %86 : vector<8xf32> to vector<8x1xf32>
    %cst_37 = arith.constant 3.200000e+01 : f32
    %88 = vector.broadcast %cst_37 : f32 to vector<8x1xf32>
    %89 = arith.divf %87, %88 : vector<8x1xf32>
    %90 = vector.broadcast %89 : vector<8x1xf32> to vector<8x32xf32>
    %91 = arith.subf %85, %90 : vector<8x32xf32>
    %92 = arith.mulf %91, %91 : vector<8x32xf32>
    %cst_38 = arith.constant dense<0.000000e+00> : vector<8xf32>
    %93 = vector.multi_reduction <add>, %92, %cst_38 [1] : vector<8x32xf32> to vector<8xf32>
    %94 = vector.shape_cast %93 : vector<8xf32> to vector<8x1xf32>
    %cst_39 = arith.constant 3.200000e+01 : f32
    %95 = vector.broadcast %cst_39 : f32 to vector<8x1xf32>
    %96 = arith.divf %94, %95 : vector<8x1xf32>
    %97 = vector.broadcast %89 : vector<8x1xf32> to vector<8x32xf32>
    %98 = arith.subf %85, %97 : vector<8x32xf32>
    %cst_40 = arith.constant 9.99999974E-6 : f32
    %99 = vector.broadcast %cst_40 : f32 to vector<8x1xf32>
    %100 = arith.addf %96, %99 : vector<8x1xf32>
    %101 = math.rsqrt %100 : vector<8x1xf32>
    %102 = vector.broadcast %101 : vector<8x1xf32> to vector<8x32xf32>
    %103 = arith.mulf %98, %102 : vector<8x32xf32>
    %104 = vector.broadcast %8 : vector<1x32xf32> to vector<8x32xf32>
    %105 = arith.mulf %103, %104 : vector<8x32xf32>
    %106 = vector.broadcast %9 : vector<1x32xf32> to vector<8x32xf32>
    %107 = arith.addf %105, %106 : vector<8x32xf32>
    %cst_41 = arith.constant dense<0.000000e+00> : vector<8x64xf32>
    %108 = tpu.matmul %107, %4, %cst_41 {dimension_numbers = #tpu.dot_dimension_numbers<[1], [0], [0], [1], [0, 0, 1, 1], [], []>} : vector<8x32xf32>, vector<32x64xf32>, vector<8x64xf32> -> vector<8x64xf32>
    %109 = vector.broadcast %10 : vector<1x64xf32> to vector<8x64xf32>
    %110 = arith.addf %108, %109 : vector<8x64xf32>
    %cst_42 = arith.constant 5.000000e-01 : f32
    %111 = vector.broadcast %cst_42 : f32 to vector<8x64xf32>
    %112 = arith.mulf %111, %110 : vector<8x64xf32>
    %cst_43 = arith.constant 0.707106769 : f32
    %113 = vector.broadcast %cst_43 : f32 to vector<8x64xf32>
    %114 = arith.mulf %110, %113 : vector<8x64xf32>
    %115 = math.erf %114 : vector<8x64xf32>
    %cst_44 = arith.constant 1.000000e+00 : f32
    %116 = vector.broadcast %cst_44 : f32 to vector<8x64xf32>
    %117 = arith.addf %116, %115 : vector<8x64xf32>
    %118 = arith.mulf %112, %117 : vector<8x64xf32>
    %cst_45 = arith.constant dense<0.000000e+00> : vector<8x32xf32>
    %119 = tpu.matmul %118, %5, %cst_45 {dimension_numbers = #tpu.dot_dimension_numbers<[1], [0], [0], [1], [0, 0, 1, 1], [], []>} : vector<8x64xf32>, vector<64x32xf32>, vector<8x32xf32> -> vector<8x32xf32>
    %120 = vector.broadcast %11 : vector<1x32xf32> to vector<8x32xf32>
    %121 = arith.addf %119, %120 : vector<8x32xf32>
    %122 = arith.addf %121, %107 : vector<8x32xf32>
    %cst_46 = arith.constant dense<0.000000e+00> : vector<8xf32>
    %123 = vector.multi_reduction <add>, %122, %cst_46 [1] : vector<8x32xf32> to vector<8xf32>
    %124 = vector.shape_cast %123 : vector<8xf32> to vector<8x1xf32>
    %cst_47 = arith.constant 3.200000e+01 : f32
    %125 = vector.broadcast %cst_47 : f32 to vector<8x1xf32>
    %126 = arith.divf %124, %125 : vector<8x1xf32>
    %127 = vector.broadcast %126 : vector<8x1xf32> to vector<8x32xf32>
    %128 = arith.subf %122, %127 : vector<8x32xf32>
    %129 = arith.mulf %128, %128 : vector<8x32xf32>
    %cst_48 = arith.constant dense<0.000000e+00> : vector<8xf32>
    %130 = vector.multi_reduction <add>, %129, %cst_48 [1] : vector<8x32xf32> to vector<8xf32>
    %131 = vector.shape_cast %130 : vector<8xf32> to vector<8x1xf32>
    %cst_49 = arith.constant 3.200000e+01 : f32
    %132 = vector.broadcast %cst_49 : f32 to vector<8x1xf32>
    %133 = arith.divf %131, %132 : vector<8x1xf32>
    %134 = vector.broadcast %126 : vector<8x1xf32> to vector<8x32xf32>
    %135 = arith.subf %122, %134 : vector<8x32xf32>
    %cst_50 = arith.constant 9.99999974E-6 : f32
    %136 = vector.broadcast %cst_50 : f32 to vector<8x1xf32>
    %137 = arith.addf %133, %136 : vector<8x1xf32>
    %138 = math.rsqrt %137 : vector<8x1xf32>
    %139 = vector.broadcast %138 : vector<8x1xf32> to vector<8x32xf32>
    %140 = arith.mulf %135, %139 : vector<8x32xf32>
    %141 = vector.broadcast %12 : vector<1x32xf32> to vector<8x32xf32>
    %142 = arith.mulf %140, %141 : vector<8x32xf32>
    %143 = vector.broadcast %13 : vector<1x32xf32> to vector<8x32xf32>
    %144 = arith.addf %142, %143 : vector<8x32xf32>
    %c0_51 = arith.constant 0 : index
    %c0_52 = arith.constant 0 : index
    %c0_53 = arith.constant 0 : index
    %145 = vector.load %arg3[%c0_51, %c0_52, %c0_53] : memref<1x8x32xf32, #tpu.memory_space<vmem>>, vector<1x8x32xf32>
    %146 = vector.shape_cast %145 : vector<1x8x32xf32> to vector<8x32xf32>
    %147 = vector.shape_cast %144 : vector<8x32xf32> to vector<1x8x32xf32>
    tpu.vector_store %arg3[%c0_51, %c0_52, %c0_53], %147 {strides = array<i32>} : memref<1x8x32xf32, #tpu.memory_space<vmem>>, vector<1x8x32xf32>,
    return
  }
  func.func @transform_0(%arg0: i32) -> (i32, i32, i32) {
    %c0_i32 = arith.constant 0 : i32
    %c0_i32_0 = arith.constant 0 : i32
    %c0_i32_1 = arith.constant 0 : i32
    return %arg0, %c0_i32, %c0_i32_0 : i32, i32, i32
  }
  func.func @transform_1(%arg0: i32) -> (i32, i32) {
    %c0_i32 = arith.constant 0 : i32
    %c0_i32_0 = arith.constant 0 : i32
    %c0_i32_1 = arith.constant 0 : i32
    return %c0_i32, %c0_i32_0 : i32, i32
  }
  func.func @transform_2(%arg0: i32) -> (i32, i32, i32) {
    %c0_i32 = arith.constant 0 : i32
    %c0_i32_0 = arith.constant 0 : i32
    %c0_i32_1 = arith.constant 0 : i32
    return %arg0, %c0_i32, %c0_i32_0 : i32, i32, i32
  }
}

</mosaic_0001>

<llo_original>
// kernel: transformer_block.1
$region0: #{transformer_block.1}
  #allocation0 [shape = 'u32[]', space=smem, size = 0x4, offset = 0x4, fixed_abs, tag = 'smem constant byte address 0x4 - core index']
  #allocation1 [shape = 'u32[144,128]{1,0:T(1,128)}', space=vmem, size = 0x12000, scoped, tag = 'internal scratch']
  %s0 = inlined_call_operand.vmem [shape: f32[2,8,32], index: 0, kind: input, shape index: {}]
  %s1 = inlined_call_operand.hbm [shape: f32[168,128], index: 1, kind: input, shape index: {}]
  %s2 = inlined_call_operand.vmem [shape: f32[2,8,32], index: 2, kind: output, shape index: {}]
  %s3 = sld [smem:[#allocation0]]
  $region45: #{transformer_block.1} parent=0
    _
  %s5 = ssub.s32 1, %s3
  %s6 = scalar_select 0, %s5, %s3
  $region1: #{transformer_block.1} parent=0
    #allocation2 [shape = 'u8[86016]{0}', space=vmem, size = 0x15000, scoped, tag = 'input window, operand 1, single buffered']
    #allocation3 [shape = 's32[2]{0}', space=sflag, size = 0x8, scoped, tag = 'scoped memory for transformer_block.1']
    %7 = vsyncpa [#allocation3], 0
    loop: start=0, step=1, limit=4
    $region2: #{transformer_block.1} parent=1 // loop_pre_header
      _
    $region3: #{transformer_block.1} parent=1 // loop_header
      %s9 = sphi 0, %s13
      %p10 = scmp.ge.s32.totalorder %s9, 4
      %s19 = sphi 0, %s21
      %s22 = sphi 0, %s19
      %s23 = sphi 0, %s22
      %s39 = sphi 0, %s23
      %s43 = sphi 0, %s43
      %s45 = sphi 0, %s43
      %s46 = sphi 0, %s45
      %s60 = sphi 0, %s46
      %s66 = sphi 0, %s68
      %s69 = sphi 0, %s66
      %s70 = sphi 0, %s69
      %s86 = sphi 0, %s70
    $region4: #{transformer_block.1} parent=1 // loop_header_branch
      %12 = sbr.rel (%p10) target = $region8
    $region5: #{transformer_block.1} parent=1 // loop_body
      %s14 = ssub.s32 %s9, 1
      %s15 = ssub.s32 %s9, 2
      %s16 = sadd.s32 %s9, 1
      %s17 = ssub.s32 %s9, %s16
      %p18 = scmp.eq.s32.totalorder %s17, 0
      %s20 = sadd.s32 %s19, 1
      %s21 = scalar_select %p18, %s19, %s20
      %p24 = pneg %p18
      %p25 = scmp.eq.s32.totalorder %s9, 1
      %p26 = por %p24, %p25
      %p27 = scmp.ne.s32.totalorder %s19, %s22
      %p28 = scmp.eq.s32.totalorder %s9, 0
      %p29 = por %p27, %p28
      %p30 = scmp.ne.s32.totalorder %s19, %s22
      %p31 = scmp.eq.s32.totalorder %s14, 1
      %p32 = por %p30, %p31
      %p33 = scmp.ne.s32.totalorder %s22, %s23
      %p34 = scmp.eq.s32.totalorder %s14, 0
      %p35 = por %p33, %p34
      %p36 = scmp.ne.s32.totalorder %s22, %s23
      %p37 = scmp.eq.s32.totalorder %s15, 1
      %p38 = por %p36, %p37
      %p40 = scmp.ne.s32.totalorder %s23, %s39
      %p41 = scmp.eq.s32.totalorder %s15, 0
      %p42 = por %p40, %p41
      %s44 = sadd.s32 %s43, 1
      %p47 = scmp.eq.s32.totalorder %s9, 1
      %p48 = scmp.ne.s32.totalorder %s43, %s45
      %p49 = scmp.eq.s32.totalorder %s9, 0
      %p50 = por %p48, %p49
      %p51 = scmp.ne.s32.totalorder %s43, %s45
      %p52 = scmp.eq.s32.totalorder %s14, 1
      %p53 = por %p51, %p52
      %p54 = scmp.ne.s32.totalorder %s45, %s46
      %p55 = scmp.eq.s32.totalorder %s14, 0
      %p56 = por %p54, %p55
      %p57 = scmp.ne.s32.totalorder %s45, %s46
      %p58 = scmp.eq.s32.totalorder %s15, 1
      %p59 = por %p57, %p58
      %p61 = scmp.ne.s32.totalorder %s46, %s60
      %p62 = scmp.eq.s32.totalorder %s15, 0
      %p63 = por %p61, %p62
      %s64 = ssub.s32 %s9, %s16
      %p65 = scmp.eq.s32.totalorder %s64, 0
      %s67 = sadd.s32 %s66, 1
      %s68 = scalar_select %p65, %s66, %s67
      %p71 = pneg %p65
      %p72 = scmp.eq.s32.totalorder %s9, 1
      %p73 = por %p71, %p72
      %p74 = scmp.ne.s32.totalorder %s66, %s69
      %p75 = scmp.eq.s32.totalorder %s9, 0
      %p76 = por %p74, %p75
      %p77 = scmp.ne.s32.totalorder %s66, %s69
      %p78 = scmp.eq.s32.totalorder %s14, 1
      %p79 = por %p77, %p78
      %p80 = scmp.ne.s32.totalorder %s69, %s70
      %p81 = scmp.eq.s32.totalorder %s14, 0
      %p82 = por %p80, %p81
      %p83 = scmp.ne.s32.totalorder %s69, %s70
      %p84 = scmp.eq.s32.totalorder %s15, 1
      %p85 = por %p83, %p84
      %p87 = scmp.ne.s32.totalorder %s70, %s86
      %p88 = scmp.eq.s32.totalorder %s15, 0
      %p89 = por %p87, %p88
      %p90 = scmp.le.s32.totalorder 1, %s9
      %p91 = scmp.lt.s32.totalorder %s9, 3
      %p92 = pnand %p90, %p91
      %p93 = pneg %p92
      // Predicated region
      $region9: #{transformer_block.1} parent=5 // pred_check
        _
      $region10: #{transformer_block.1} parent=5 // pred_check_branch
        %95 = sbr.rel (%p92) target = $region12
      $region11: #{transformer_block.1} parent=5 // pred_region
        %s96 = ssub.s32 %s9, 1
        // Predicated region
        $region13: #{transformer_block.1} parent=11 // pred_check
          %p97 = pneg %p56
        $region14: #{transformer_block.1} parent=11 // pred_check_branch
          %99 = sbr.rel (%p97) target = $region16
        $region15: #{transformer_block.1} parent=11 // pred_region
          %s101 = ssub.s32 2688, 2688
          %102 = vsyncadd [#allocation3], %s101
          %s103 = sshll.u32 [#allocation2], 4
          %s104 = int_to_ptr.vmem [resolvable:$true] %s103
          %109 = dma.hbm_to_vmem [thread:$0]  %s1, 2688, %s104, [#allocation3], 128, 128, 8
        $region16: #{transformer_block.1} parent=11 // pred_fallthru
          _
      $region12: #{transformer_block.1} parent=5 // pred_fallthru
        _
      %p110 = scmp.lt.s32.totalorder %s9, 2
      // Predicated region
      $region17: #{transformer_block.1} parent=5 // pred_check
        %p111 = pneg %p110
      $region18: #{transformer_block.1} parent=5 // pred_check_branch
        %113 = sbr.rel (%p111) target = $region20
      $region19: #{transformer_block.1} parent=5 // pred_region
        // Predicated region
        $region21: #{transformer_block.1} parent=19 // pred_check
          %p114 = pneg %p29
        $region22: #{transformer_block.1} parent=19 // pred_check_branch
          %116 = sbr.rel (%p114) target = $region24
        $region23: #{transformer_block.1} parent=19 // pred_region
          %p117 = scmp.lt.s32.totalorder %s9, 1
          %s118 = scalar_select %p117, %s9, 1
          %s119 = smul.addr %s118, 8
          %s120 = scalar_lea.vmem %s0, %s119
        $region24: #{transformer_block.1} parent=19 // pred_fallthru
          _
      $region20: #{transformer_block.1} parent=5 // pred_fallthru
        _
      %p121 = scmp.le.s32.totalorder 1, %s9
      %p122 = scmp.lt.s32.totalorder %s9, 3
      %p123 = pnand %p121, %p122
      %p124 = pneg %p123
      // Predicated region
      $region25: #{transformer_block.1} parent=5 // pred_check
        _
      $region26: #{transformer_block.1} parent=5 // pred_check_branch
        %126 = sbr.rel (%p123) target = $region28
      $region27: #{transformer_block.1} parent=5 // pred_region
        %s127 = ssub.s32 %s9, 1
        // Predicated region
        $region29: #{transformer_block.1} parent=27 // pred_check
          %p128 = pneg %p56
        $region30: #{transformer_block.1} parent=27 // pred_check_branch
          %130 = sbr.rel (%p128) target = $region32
        $region31: #{transformer_block.1} parent=27 // pred_region
          %131 = dma.done [#allocation3], 2688
        $region32: #{transformer_block.1} parent=27 // pred_fallthru
          _
        %p132 = scmp.lt.s32.totalorder %s14, 1
        %s133 = scalar_select %p132, %s14, 1
        %s134 = smul.addr %s133, 8
        %s135 = scalar_lea.vmem %s0, %s134
        %p136 = pneg %p35
        %p137 = pneg %p32
        %p138 = pneg %p56
        %p139 = pneg %p53
        %p140 = pneg %p82
        %p141 = pneg %p79
        %p142 = scmp.lt.s32.totalorder %s14, 1
        %s143 = scalar_select %p142, %s14, 1
        %s144 = smul.addr %s143, 8
        %s145 = scalar_lea.vmem %s2, %s144
        %p146 = scmp.lt.s32.totalorder %s14, 1
        %s147 = scalar_select %p146, %s14, 1
        %s148 = smul.addr %s147, 8
        %s149 = scalar_lea.vmem %s0, %s148
        %p150 = scmp.lt.s32.totalorder %s14, 1
        %s151 = scalar_select %p150, %s14, 1
        %s152 = smul.addr %s151, 8
        %s153 = scalar_lea.vmem %s2, %s152
        %v154 = vld [vmem:[%s149] sm:$0xff]
        %v155 = vld [vmem:[#allocation2] sm:$0xff]
        %v156 = vld [vmem:[#allocation2 + $0x8] sm:$0xff]
        %v157 = vld [vmem:[#allocation2 + $0x10] sm:$0xff]
        %v158 = vld [vmem:[#allocation2 + $0x18] sm:$0xff]
        %v159 = vld [vmem:[#allocation2 + $0x20] sm:$0xff]
        %v160 = vld [vmem:[#allocation2 + $0x28] sm:$0xff]
        %v161 = vld [vmem:[#allocation2 + $0x30] sm:$0xff]
        %v162 = vld [vmem:[#allocation2 + $0x38] sm:$0xff]
        %v163 = vld [vmem:[#allocation2 + $0x40] sm:$0xff]
        %v164 = vld [vmem:[#allocation2 + $0x48] sm:$0xff]
        %v165 = vld [vmem:[#allocation2 + $0x50] sm:$0xff]
        %v166 = vld [vmem:[#allocation2 + $0x58] sm:$0xff]
        %v167 = vld [vmem:[#allocation2 + $0x60] sm:$0xff]
        %v168 = vld [vmem:[#allocation2 + $0x68] sm:$0xff]
        %v169 = vld [vmem:[#allocation2 + $0x70] sm:$0xff]
        %v170 = vld [vmem:[#allocation2 + $0x78] sm:$0xff]
        %v171 = vld [vmem:[#allocation2 + $0x80] sm:$0xff]
        %v172 = vld [vmem:[#allocation2 + $0x88] sm:$0xff]
        %v173 = vld [vmem:[#allocation2 + $0x90] sm:$0xff]
        %v174 = vld [vmem:[#allocation2 + $0x98] sm:$0xff]
        %v175 = vld [vmem:[#allocation2 + $0xa0] sm:$0x1]
        %v176 = vld [vmem:[#allocation2 + $0xa1] sm:$0x1]
        %v177 = vld [vmem:[#allocation2 + $0xa2] sm:$0x1]
        %v178 = vld [vmem:[#allocation2 + $0xa3] sm:$0x1]
        %v179 = vld [vmem:[#allocation2 + $0xa4] sm:$0x1]
        %v180 = vld [vmem:[#allocation2 + $0xa5] sm:$0x1]
        %v181 = vld [vmem:[#allocation2 + $0xa6] sm:$0x1]
        %v182 = vld [vmem:[#allocation2 + $0xa7] sm:$0x1]
        %v183 = vlaneseq
        %v184 = vshrl.u32 %v183, 7
        %v185 = vsub.s32 0, %v184
        %v186 = vrot.slane %v175, %v185
        %vm187 = vcmask 261120
        %v189 = vsel %vm187, %v154, 0
        %191 = vmatprep.subr.mxu0 0.0
        %192 = vmatpush1.msra.mxu0 %v155
        %193 = vmatprep.subr.mxu0 0.0
        %194 = vmatpush1.msra.mxu0 %v156
        %195 = vmatprep.subr.mxu0 0.0
        %196 = vmatpush1.msra.mxu0 %v157
        %197 = vmatprep.subr.mxu0 0.0
        %198 = vmatpush1.msra.mxu0 %v158
        %199 = vmatprep.subr.mxu0 0.0
        %200 = vmatpush1.msra.mxu0 0.0
        %201 = vmatprep.subr.mxu0 0.0
        %202 = vmatpush1.msra.mxu0 0.0
        %203 = vmatprep.subr.mxu0 0.0
        %204 = vmatpush1.msra.mxu0 0.0
        %205 = vmatprep.subr.mxu0 0.0
        %206 = vmatpush1.msra.mxu0 0.0
        %207 = vmatprep.subr.mxu0 0.0
        %208 = vmatpush1.msra.mxu0 0.0
        %209 = vmatprep.subr.mxu0 0.0
        %210 = vmatpush1.msra.mxu0 0.0
        %211 = vmatprep.subr.mxu0 0.0
        %212 = vmatpush1.msra.mxu0 0.0
        %213 = vmatprep.subr.mxu0 0.0
        %214 = vmatpush1.msra.mxu0 0.0
        %215 = vmatprep.subr.mxu0 0.0
        %216 = vmatpush1.msra.mxu0 0.0
        %217 = vmatprep.subr.mxu0 0.0
        %218 = vmatpush1.msra.mxu0 0.0
        %219 = vmatprep.subr.mxu0 0.0
        %220 = vmatpush1.msra.mxu0 0.0
        %221 = vmatprep.subr.mxu0 0.0
        %222 = vmatpush1.msra.mxu0 0.0
        %223 = vmatprep.subr.mxu0 0.0
        %224 = vmatpush1.msra.mxu0 0.0
        %225 = vmatprep.subr.mxu0 0.0
        %226 = vmatpush1.msra.mxu0 0.0
        %227 = vmatprep.subr.mxu0 0.0
        %228 = vmatpush1.msra.mxu0 0.0
        %229 = vmatprep.subr.mxu0 0.0
        %230 = vmatpush1.msra.mxu0 0.0
        %231 = vmatprep.subr.mxu0 0.0
        %232 = vmatpush1.msra.mxu0 0.0
        %233 = vmatprep.subr.mxu0 0.0
        %234 = vmatpush1.msra.mxu0 0.0
        %235 = vmatprep.subr.mxu0 0.0
        %236 = vmatpush1.msra.mxu0 0.0
        %237 = vmatprep.subr.mxu0 0.0
        %238 = vmatpush1.msra.mxu0 0.0
        %239 = vmatprep.subr.mxu0 0.0
        %240 = vmatpush1.msra.mxu0 0.0
        %241 = vmatprep.subr.mxu0 0.0
        %242 = vmatpush1.msra.mxu0 0.0
        %243 = vmatprep.subr.mxu0 0.0
        %244 = vmatpush1.msra.mxu0 0.0
        %245 = vmatprep.subr.mxu0 0.0
        %246 = vmatpush1.msra.mxu0 0.0
        %247 = vmatprep.subr.mxu0 0.0
        %248 = vmatpush1.msra.mxu0 0.0
        %249 = vmatprep.subr.mxu0 0.0
        %250 = vmatpush1.msra.mxu0 0.0
        %251 = vmatprep.subr.mxu0 0.0
        %252 = vmatpush1.msra.mxu0 0.0
        %253 = vmatprep.subr.mxu0 0.0
        %254 = vmatpush1.msra.mxu0 0.0
        %255 = vmatprep.mubr.f32.mxu0 0.0
        %256 = vmatmul.mubr.f32.gmra.mrb[0].mxu0 %v189
        %v257 = vpop.f32.mrb[0].mxu0
        %v258 = vadd.f32 %v186, %v257
        %v259 = vpop.f32.mrb[0].mxu0
        %260 = vdwg.mxu0
        %v261 = vmul.f32 %v258, 0.35355338
        %263 = vrot.lane.b32.xlu0 %v258, 96
        %v264 = vpop.permute.xlu0 %263
        %vm265 = vcmask 64512
        %v267 = vsel %vm265, %v261, 0
        %v269 = vsel %vm265, %v264, 0
        %271 = vmatprep.subr.mxu0 0.0
        %272 = vmatpush1.xpose.msra.mxu0 %v269
        %273 = vmatprep.subr.mxu0 0.0
        %274 = vmatpush1.xpose.msra.mxu0 0.0
        %275 = vmatprep.subr.mxu0 0.0
        %276 = vmatpush1.xpose.msra.mxu0 0.0
        %277 = vmatprep.subr.mxu0 0.0
        %278 = vmatpush1.xpose.msra.mxu0 0.0
        %279 = vmatprep.subr.mxu0 0.0
        %280 = vmatpush1.xpose.msra.mxu0 0.0
        %281 = vmatprep.subr.mxu0 0.0
        %282 = vmatpush1.xpose.msra.mxu0 0.0
        %283 = vmatprep.subr.mxu0 0.0
        %284 = vmatpush1.xpose.msra.mxu0 0.0
        %285 = vmatprep.subr.mxu0 0.0
        %286 = vmatpush1.xpose.msra.mxu0 0.0
        %287 = vmatprep.subr.mxu0 0.0
        %288 = vmatpush1.xpose.msra.mxu0 0.0
        %289 = vmatprep.subr.mxu0 0.0
        %290 = vmatpush1.xpose.msra.mxu0 0.0
        %291 = vmatprep.subr.mxu0 0.0
        %292 = vmatpush1.xpose.msra.mxu0 0.0
        %293 = vmatprep.subr.mxu0 0.0
        %294 = vmatpush1.xpose.msra.mxu0 0.0
        %295 = vmatprep.subr.mxu0 0.0
        %296 = vmatpush1.xpose.msra.mxu0 0.0
        %297 = vmatprep.subr.mxu0 0.0
        %298 = vmatpush1.xpose.msra.mxu0 0.0
        %299 = vmatprep.subr.mxu0 0.0
        %300 = vmatpush1.xpose.msra.mxu0 0.0
        %301 = vmatprep.subr.mxu0 0.0
        %302 = vmatpush1.xpose.msra.mxu0 0.0
        %303 = vmatprep.subr.mxu0 0.0
        %304 = vmatpush1.xpose.msra.mxu0 0.0
        %305 = vmatprep.subr.mxu0 0.0
        %306 = vmatpush1.xpose.msra.mxu0 0.0
        %307 = vmatprep.subr.mxu0 0.0
        %308 = vmatpush1.xpose.msra.mxu0 0.0
        %309 = vmatprep.subr.mxu0 0.0
        %310 = vmatpush1.xpose.msra.mxu0 0.0
        %311 = vmatprep.subr.mxu0 0.0
        %312 = vmatpush1.xpose.msra.mxu0 0.0
        %313 = vmatprep.subr.mxu0 0.0
        %314 = vmatpush1.xpose.msra.mxu0 0.0
        %315 = vmatprep.subr.mxu0 0.0
        %316 = vmatpush1.xpose.msra.mxu0 0.0
        %317 = vmatprep.subr.mxu0 0.0
        %318 = vmatpush1.xpose.msra.mxu0 0.0
        %319 = vmatprep.subr.mxu0 0.0
        %320 = vmatpush1.xpose.msra.mxu0 0.0
        %321 = vmatprep.subr.mxu0 0.0
        %322 = vmatpush1.xpose.msra.mxu0 0.0
        %323 = vmatprep.subr.mxu0 0.0
        %324 = vmatpush1.xpose.msra.mxu0 0.0
        %325 = vmatprep.subr.mxu0 0.0
        %326 = vmatpush1.xpose.msra.mxu0 0.0
        %327 = vmatprep.subr.mxu0 0.0
        %328 = vmatpush1.xpose.msra.mxu0 0.0
        %329 = vmatprep.subr.mxu0 0.0
        %330 = vmatpush1.xpose.msra.mxu0 0.0
        %331 = vmatprep.subr.mxu0 0.0
        %332 = vmatpush1.xpose.msra.mxu0 0.0
        %333 = vmatprep.subr.mxu0 0.0
        %334 = vmatpush1.xpose.msra.mxu0 0.0
        %335 = vmatprep.mubr.f32.mxu0 0.0
        %336 = vmatmul.mubr.f32.gmra.mrb[0].mxu0 %v267
        %v337 = vpop.f32.mrb[0].mxu0
        %v338 = vadd.f32 0.0, %v337
        %v339 = vpop.f32.mrb[0].mxu0
        %340 = vdwg.mxu0
        %v341 = vsel %vm265, %v338, -inf
        %342 = vmax.xlane.f32.xlu0 %v341
        %v343 = vpop.xlane.xlu0 %342
        %v344 = vsub.f32 %v338, %v343
        %v345 = vmul.f32 %v344, 1.442695
        %v346 = vpow.pop %v345
        %v347 = vsel %vm265, %v346, 0.0
        %348 = vadd.xlane.f32.xlu0 %v347
        %v349 = vpop.xlane.xlu0 %348
        %v350 = vrcp.pop %v349
        %v351 = vmul.f32 %v346, %v350
        %352 = vrot.lane.b32.xlu0 %v258, 64
        %v353 = vpop.permute.xlu0 %352
        %v356 = vsel %vm265, %v351, 0
        %358 = vmatprep.subr.mxu0 0.0
        %359 = vmatpush1.msra.mxu0 %v353
        %360 = vmatprep.subr.mxu0 0.0
        %361 = vmatpush1.msra.mxu0 0.0
        %362 = vmatprep.subr.mxu0 0.0
        %363 = vmatpush1.msra.mxu0 0.0
        %364 = vmatprep.subr.mxu0 0.0
        %365 = vmatpush1.msra.mxu0 0.0
        %366 = vmatprep.subr.mxu0 0.0
        %367 = vmatpush1.msra.mxu0 0.0
        %368 = vmatprep.subr.mxu0 0.0
        %369 = vmatpush1.msra.mxu0 0.0
        %370 = vmatprep.subr.mxu0 0.0
        %371 = vmatpush1.msra.mxu0 0.0
        %372 = vmatprep.subr.mxu0 0.0
        %373 = vmatpush1.msra.mxu0 0.0
        %374 = vmatprep.subr.mxu0 0.0
        %375 = vmatpush1.msra.mxu0 0.0
        %376 = vmatprep.subr.mxu0 0.0
        %377 = vmatpush1.msra.mxu0 0.0
        %378 = vmatprep.subr.mxu0 0.0
        %379 = vmatpush1.msra.mxu0 0.0
        %380 = vmatprep.subr.mxu0 0.0
        %381 = vmatpush1.msra.mxu0 0.0
        %382 = vmatprep.subr.mxu0 0.0
        %383 = vmatpush1.msra.mxu0 0.0
        %384 = vmatprep.subr.mxu0 0.0
        %385 = vmatpush1.msra.mxu0 0.0
        %386 = vmatprep.subr.mxu0 0.0
        %387 = vmatpush1.msra.mxu0 0.0
        %388 = vmatprep.subr.mxu0 0.0
        %389 = vmatpush1.msra.mxu0 0.0
        %390 = vmatprep.subr.mxu0 0.0
        %391 = vmatpush1.msra.mxu0 0.0
        %392 = vmatprep.subr.mxu0 0.0
        %393 = vmatpush1.msra.mxu0 0.0
        %394 = vmatprep.subr.mxu0 0.0
        %395 = vmatpush1.msra.mxu0 0.0
        %396 = vmatprep.subr.mxu0 0.0
        %397 = vmatpush1.msra.mxu0 0.0
        %398 = vmatprep.subr.mxu0 0.0
        %399 = vmatpush1.msra.mxu0 0.0
        %400 = vmatprep.subr.mxu0 0.0
        %401 = vmatpush1.msra.mxu0 0.0
        %402 = vmatprep.subr.mxu0 0.0
        %403 = vmatpush1.msra.mxu0 0.0
        %404 = vmatprep.subr.mxu0 0.0
        %405 = vmatpush1.msra.mxu0 0.0
        %406 = vmatprep.subr.mxu0 0.0
        %407 = vmatpush1.msra.mxu0 0.0
        %408 = vmatprep.subr.mxu0 0.0
        %409 = vmatpush1.msra.mxu0 0.0
        %410 = vmatprep.subr.mxu0 0.0
        %411 = vmatpush1.msra.mxu0 0.0
        %412 = vmatprep.subr.mxu0 0.0
        %413 = vmatpush1.msra.mxu0 0.0
        %414 = vmatprep.subr.mxu0 0.0
        %415 = vmatpush1.msra.mxu0 0.0
        %416 = vmatprep.subr.mxu0 0.0
        %417 = vmatpush1.msra.mxu0 0.0
        %418 = vmatprep.subr.mxu0 0.0
        %419 = vmatpush1.msra.mxu0 0.0
        %420 = vmatprep.subr.mxu0 0.0
        %421 = vmatpush1.msra.mxu0 0.0
        %422 = vmatprep.mubr.f32.mxu0 0.0
        %423 = vmatmul.mubr.f32.gmra.mrb[0].mxu0 %v356
        %v424 = vpop.f32.mrb[0].mxu0
        %v425 = vadd.f32 0.0, %v424
        %v426 = vpop.f32.mrb[0].mxu0
        %427 = vdwg.mxu0
        %428 = vrot.lane.b32.xlu0 %v261, 120
        %v429 = vpop.permute.xlu0 %428
        %430 = vrot.lane.b32.xlu0 %v258, 88
        %v431 = vpop.permute.xlu0 %430
        %v432 = vsel %vm265, %v429, 0
        %v434 = vsel %vm265, %v431, 0
        %436 = vmatprep.subr.mxu0 0.0
        %437 = vmatpush1.xpose.msra.mxu0 %v434
        %438 = vmatprep.subr.mxu0 0.0
        %439 = vmatpush1.xpose.msra.mxu0 0.0
        %440 = vmatprep.subr.mxu0 0.0
        %441 = vmatpush1.xpose.msra.mxu0 0.0
        %442 = vmatprep.subr.mxu0 0.0
        %443 = vmatpush1.xpose.msra.mxu0 0.0
        %444 = vmatprep.subr.mxu0 0.0
        %445 = vmatpush1.xpose.msra.mxu0 0.0
        %446 = vmatprep.subr.mxu0 0.0
        %447 = vmatpush1.xpose.msra.mxu0 0.0
        %448 = vmatprep.subr.mxu0 0.0
        %449 = vmatpush1.xpose.msra.mxu0 0.0
        %450 = vmatprep.subr.mxu0 0.0
        %451 = vmatpush1.xpose.msra.mxu0 0.0
        %452 = vmatprep.subr.mxu0 0.0
        %453 = vmatpush1.xpose.msra.mxu0 0.0
        %454 = vmatprep.subr.mxu0 0.0
        %455 = vmatpush1.xpose.msra.mxu0 0.0
        %456 = vmatprep.subr.mxu0 0.0
        %457 = vmatpush1.xpose.msra.mxu0 0.0
        %458 = vmatprep.subr.mxu0 0.0
        %459 = vmatpush1.xpose.msra.mxu0 0.0
        %460 = vmatprep.subr.mxu0 0.0
        %461 = vmatpush1.xpose.msra.mxu0 0.0
        %462 = vmatprep.subr.mxu0 0.0
        %463 = vmatpush1.xpose.msra.mxu0 0.0
        %464 = vmatprep.subr.mxu0 0.0
        %465 = vmatpush1.xpose.msra.mxu0 0.0
        %466 = vmatprep.subr.mxu0 0.0
        %467 = vmatpush1.xpose.msra.mxu0 0.0
        %468 = vmatprep.subr.mxu0 0.0
        %469 = vmatpush1.xpose.msra.mxu0 0.0
        %470 = vmatprep.subr.mxu0 0.0
        %471 = vmatpush1.xpose.msra.mxu0 0.0
        %472 = vmatprep.subr.mxu0 0.0
        %473 = vmatpush1.xpose.msra.mxu0 0.0
        %474 = vmatprep.subr.mxu0 0.0
        %475 = vmatpush1.xpose.msra.mxu0 0.0
        %476 = vmatprep.subr.mxu0 0.0
        %477 = vmatpush1.xpose.msra.mxu0 0.0
        %478 = vmatprep.subr.mxu0 0.0
        %479 = vmatpush1.xpose.msra.mxu0 0.0
        %480 = vmatprep.subr.mxu0 0.0
        %481 = vmatpush1.xpose.msra.mxu0 0.0
        %482 = vmatprep.subr.mxu0 0.0
        %483 = vmatpush1.xpose.msra.mxu0 0.0
        %484 = vmatprep.subr.mxu0 0.0
        %485 = vmatpush1.xpose.msra.mxu0 0.0
        %486 = vmatprep.subr.mxu0 0.0
        %487 = vmatpush1.xpose.msra.mxu0 0.0
        %488 = vmatprep.subr.mxu0 0.0
        %489 = vmatpush1.xpose.msra.mxu0 0.0
        %490 = vmatprep.subr.mxu0 0.0
        %491 = vmatpush1.xpose.msra.mxu0 0.0
        %492 = vmatprep.subr.mxu0 0.0
        %493 = vmatpush1.xpose.msra.mxu0 0.0
        %494 = vmatprep.subr.mxu0 0.0
        %495 = vmatpush1.xpose.msra.mxu0 0.0
        %496 = vmatprep.subr.mxu0 0.0
        %497 = vmatpush1.xpose.msra.mxu0 0.0
        %498 = vmatprep.subr.mxu0 0.0
        %499 = vmatpush1.xpose.msra.mxu0 0.0
        %500 = vmatprep.mubr.f32.mxu0 0.0
        %501 = vmatmul.mubr.f32.gmra.mrb[0].mxu0 %v432
        %v502 = vpop.f32.mrb[0].mxu0
        %v503 = vadd.f32 0.0, %v502
        %v504 = vpop.f32.mrb[0].mxu0
        %505 = vdwg.mxu0
        %v506 = vsel %vm265, %v503, -inf
        %507 = vmax.xlane.f32.xlu0 %v506
        %v508 = vpop.xlane.xlu0 %507
        %v509 = vsub.f32 %v503, %v508
        %v510 = vmul.f32 %v509, 1.442695
        %v511 = vpow.pop %v510
        %v512 = vsel %vm265, %v511, 0.0
        %513 = vadd.xlane.f32.xlu0 %v512
        %v514 = vpop.xlane.xlu0 %513
        %v515 = vrcp.pop %v514
        %v516 = vmul.f32 %v511, %v515
        %517 = vrot.lane.b32.xlu0 %v258, 56
        %v518 = vpop.permute.xlu0 %517
        %v521 = vsel %vm265, %v516, 0
        %523 = vmatprep.subr.mxu0 0.0
        %524 = vmatpush1.msra.mxu0 %v518
        %525 = vmatprep.subr.mxu0 0.0
        %526 = vmatpush1.msra.mxu0 0.0
        %527 = vmatprep.subr.mxu0 0.0
        %528 = vmatpush1.msra.mxu0 0.0
        %529 = vmatprep.subr.mxu0 0.0
        %530 = vmatpush1.msra.mxu0 0.0
        %531 = vmatprep.subr.mxu0 0.0
        %532 = vmatpush1.msra.mxu0 0.0
        %533 = vmatprep.subr.mxu0 0.0
        %534 = vmatpush1.msra.mxu0 0.0
        %535 = vmatprep.subr.mxu0 0.0
        %536 = vmatpush1.msra.mxu0 0.0
        %537 = vmatprep.subr.mxu0 0.0
        %538 = vmatpush1.msra.mxu0 0.0
        %539 = vmatprep.subr.mxu0 0.0
        %540 = vmatpush1.msra.mxu0 0.0
        %541 = vmatprep.subr.mxu0 0.0
        %542 = vmatpush1.msra.mxu0 0.0
        %543 = vmatprep.subr.mxu0 0.0
        %544 = vmatpush1.msra.mxu0 0.0
        %545 = vmatprep.subr.mxu0 0.0
        %546 = vmatpush1.msra.mxu0 0.0
        %547 = vmatprep.subr.mxu0 0.0
        %548 = vmatpush1.msra.mxu0 0.0
        %549 = vmatprep.subr.mxu0 0.0
        %550 = vmatpush1.msra.mxu0 0.0
        %551 = vmatprep.subr.mxu0 0.0
        %552 = vmatpush1.msra.mxu0 0.0
        %553 = vmatprep.subr.mxu0 0.0
        %554 = vmatpush1.msra.mxu0 0.0
        %555 = vmatprep.subr.mxu0 0.0
        %556 = vmatpush1.msra.mxu0 0.0
        %557 = vmatprep.subr.mxu0 0.0
        %558 = vmatpush1.msra.mxu0 0.0
        %559 = vmatprep.subr.mxu0 0.0
        %560 = vmatpush1.msra.mxu0 0.0
        %561 = vmatprep.subr.mxu0 0.0
        %562 = vmatpush1.msra.mxu0 0.0
        %563 = vmatprep.subr.mxu0 0.0
        %564 = vmatpush1.msra.mxu0 0.0
        %565 = vmatprep.subr.mxu0 0.0
        %566 = vmatpush1.msra.mxu0 0.0
        %567 = vmatprep.subr.mxu0 0.0
        %568 = vmatpush1.msra.mxu0 0.0
        %569 = vmatprep.subr.mxu0 0.0
        %570 = vmatpush1.msra.mxu0 0.0
        %571 = vmatprep.subr.mxu0 0.0
        %572 = vmatpush1.msra.mxu0 0.0
        %573 = vmatprep.subr.mxu0 0.0
        %574 = vmatpush1.msra.mxu0 0.0
        %575 = vmatprep.subr.mxu0 0.0
        %576 = vmatpush1.msra.mxu0 0.0
        %577 = vmatprep.subr.mxu0 0.0
        %578 = vmatpush1.msra.mxu0 0.0
        %579 = vmatprep.subr.mxu0 0.0
        %580 = vmatpush1.msra.mxu0 0.0
        %581 = vmatprep.subr.mxu0 0.0
        %582 = vmatpush1.msra.mxu0 0.0
        %583 = vmatprep.subr.mxu0 0.0
        %584 = vmatpush1.msra.mxu0 0.0
        %585 = vmatprep.subr.mxu0 0.0
        %586 = vmatpush1.msra.mxu0 0.0
        %587 = vmatprep.mubr.f32.mxu0 0.0
        %588 = vmatmul.mubr.f32.gmra.mrb[0].mxu0 %v521
        %v589 = vpop.f32.mrb[0].mxu0
        %v590 = vadd.f32 0.0, %v589
        %v591 = vpop.f32.mrb[0].mxu0
        %592 = vdwg.mxu0
        %593 = vrot.lane.b32.xlu0 %v261, 112
        %v594 = vpop.permute.xlu0 %593
        %595 = vrot.lane.b32.xlu0 %v258, 80
        %v596 = vpop.permute.xlu0 %595
        %v597 = vsel %vm265, %v594, 0
        %v599 = vsel %vm265, %v596, 0
        %601 = vmatprep.subr.mxu0 0.0
        %602 = vmatpush1.xpose.msra.mxu0 %v599
        %603 = vmatprep.subr.mxu0 0.0
        %604 = vmatpush1.xpose.msra.mxu0 0.0
        %605 = vmatprep.subr.mxu0 0.0
        %606 = vmatpush1.xpose.msra.mxu0 0.0
        %607 = vmatprep.subr.mxu0 0.0
        %608 = vmatpush1.xpose.msra.mxu0 0.0
        %609 = vmatprep.subr.mxu0 0.0
        %610 = vmatpush1.xpose.msra.mxu0 0.0
        %611 = vmatprep.subr.mxu0 0.0
        %612 = vmatpush1.xpose.msra.mxu0 0.0
        %613 = vmatprep.subr.mxu0 0.0
        %614 = vmatpush1.xpose.msra.mxu0 0.0
        %615 = vmatprep.subr.mxu0 0.0
        %616 = vmatpush1.xpose.msra.mxu0 0.0
        %617 = vmatprep.subr.mxu0 0.0
        %618 = vmatpush1.xpose.msra.mxu0 0.0
        %619 = vmatprep.subr.mxu0 0.0
        %620 = vmatpush1.xpose.msra.mxu0 0.0
        %621 = vmatprep.subr.mxu0 0.0
        %622 = vmatpush1.xpose.msra.mxu0 0.0
        %623 = vmatprep.subr.mxu0 0.0
        %624 = vmatpush1.xpose.msra.mxu0 0.0
        %625 = vmatprep.subr.mxu0 0.0
        %626 = vmatpush1.xpose.msra.mxu0 0.0
        %627 = vmatprep.subr.mxu0 0.0
        %628 = vmatpush1.xpose.msra.mxu0 0.0
        %629 = vmatprep.subr.mxu0 0.0
        %630 = vmatpush1.xpose.msra.mxu0 0.0
        %631 = vmatprep.subr.mxu0 0.0
        %632 = vmatpush1.xpose.msra.mxu0 0.0
        %633 = vmatprep.subr.mxu0 0.0
        %634 = vmatpush1.xpose.msra.mxu0 0.0
        %635 = vmatprep.subr.mxu0 0.0
        %636 = vmatpush1.xpose.msra.mxu0 0.0
        %637 = vmatprep.subr.mxu0 0.0
        %638 = vmatpush1.xpose.msra.mxu0 0.0
        %639 = vmatprep.subr.mxu0 0.0
        %640 = vmatpush1.xpose.msra.mxu0 0.0
        %641 = vmatprep.subr.mxu0 0.0
        %642 = vmatpush1.xpose.msra.mxu0 0.0
        %643 = vmatprep.subr.mxu0 0.0
        %644 = vmatpush1.xpose.msra.mxu0 0.0
        %645 = vmatprep.subr.mxu0 0.0
        %646 = vmatpush1.xpose.msra.mxu0 0.0
        %647 = vmatprep.subr.mxu0 0.0
        %648 = vmatpush1.xpose.msra.mxu0 0.0
        %649 = vmatprep.subr.mxu0 0.0
        %650 = vmatpush1.xpose.msra.mxu0 0.0
        %651 = vmatprep.subr.mxu0 0.0
        %652 = vmatpush1.xpose.msra.mxu0 0.0
        %653 = vmatprep.subr.mxu0 0.0
        %654 = vmatpush1.xpose.msra.mxu0 0.0
        %655 = vmatprep.subr.mxu0 0.0
        %656 = vmatpush1.xpose.msra.mxu0 0.0
        %657 = vmatprep.subr.mxu0 0.0
        %658 = vmatpush1.xpose.msra.mxu0 0.0
        %659 = vmatprep.subr.mxu0 0.0
        %660 = vmatpush1.xpose.msra.mxu0 0.0
        %661 = vmatprep.subr.mxu0 0.0
        %662 = vmatpush1.xpose.msra.mxu0 0.0
        %663 = vmatprep.subr.mxu0 0.0
        %664 = vmatpush1.xpose.msra.mxu0 0.0
        %665 = vmatprep.mubr.f32.mxu0 0.0
        %666 = vmatmul.mubr.f32.gmra.mrb[0].mxu0 %v597
        %v667 = vpop.f32.mrb[0].mxu0
        %v668 = vadd.f32 0.0, %v667
        %v669 = vpop.f32.mrb[0].mxu0
        %670 = vdwg.mxu0
        %v671 = vsel %vm265, %v668, -inf
        %672 = vmax.xlane.f32.xlu0 %v671
        %v673 = vpop.xlane.xlu0 %672
        %v674 = vsub.f32 %v668, %v673
        %v675 = vmul.f32 %v674, 1.442695
        %v676 = vpow.pop %v675
        %v677 = vsel %vm265, %v676, 0.0
        %678 = vadd.xlane.f32.xlu0 %v677
        %v679 = vpop.xlane.xlu0 %678
        %v680 = vrcp.pop %v679
        %v681 = vmul.f32 %v676, %v680
        %682 = vrot.lane.b32.xlu0 %v258, 48
        %v683 = vpop.permute.xlu0 %682
        %v686 = vsel %vm265, %v681, 0
        %688 = vmatprep.subr.mxu0 0.0
        %689 = vmatpush1.msra.mxu0 %v683
        %690 = vmatprep.subr.mxu0 0.0
        %691 = vmatpush1.msra.mxu0 0.0
        %692 = vmatprep.subr.mxu0 0.0
        %693 = vmatpush1.msra.mxu0 0.0
        %694 = vmatprep.subr.mxu0 0.0
        %695 = vmatpush1.msra.mxu0 0.0
        %696 = vmatprep.subr.mxu0 0.0
        %697 = vmatpush1.msra.mxu0 0.0
        %698 = vmatprep.subr.mxu0 0.0
        %699 = vmatpush1.msra.mxu0 0.0
        %700 = vmatprep.subr.mxu0 0.0
        %701 = vmatpush1.msra.mxu0 0.0
        %702 = vmatprep.subr.mxu0 0.0
        %703 = vmatpush1.msra.mxu0 0.0
        %704 = vmatprep.subr.mxu0 0.0
        %705 = vmatpush1.msra.mxu0 0.0
        %706 = vmatprep.subr.mxu0 0.0
        %707 = vmatpush1.msra.mxu0 0.0
        %708 = vmatprep.subr.mxu0 0.0
        %709 = vmatpush1.msra.mxu0 0.0
        %710 = vmatprep.subr.mxu0 0.0
        %711 = vmatpush1.msra.mxu0 0.0
        %712 = vmatprep.subr.mxu0 0.0
        %713 = vmatpush1.msra.mxu0 0.0
        %714 = vmatprep.subr.mxu0 0.0
        %715 = vmatpush1.msra.mxu0 0.0
        %716 = vmatprep.subr.mxu0 0.0
        %717 = vmatpush1.msra.mxu0 0.0
        %718 = vmatprep.subr.mxu0 0.0
        %719 = vmatpush1.msra.mxu0 0.0
        %720 = vmatprep.subr.mxu0 0.0
        %721 = vmatpush1.msra.mxu0 0.0
        %722 = vmatprep.subr.mxu0 0.0
        %723 = vmatpush1.msra.mxu0 0.0
        %724 = vmatprep.subr.mxu0 0.0
        %725 = vmatpush1.msra.mxu0 0.0
        %726 = vmatprep.subr.mxu0 0.0
        %727 = vmatpush1.msra.mxu0 0.0
        %728 = vmatprep.subr.mxu0 0.0
        %729 = vmatpush1.msra.mxu0 0.0
        %730 = vmatprep.subr.mxu0 0.0
        %731 = vmatpush1.msra.mxu0 0.0
        %732 = vmatprep.subr.mxu0 0.0
        %733 = vmatpush1.msra.mxu0 0.0
        %734 = vmatprep.subr.mxu0 0.0
        %735 = vmatpush1.msra.mxu0 0.0
        %736 = vmatprep.subr.mxu0 0.0
        %737 = vmatpush1.msra.mxu0 0.0
        %738 = vmatprep.subr.mxu0 0.0
        %739 = vmatpush1.msra.mxu0 0.0
        %740 = vmatprep.subr.mxu0 0.0
        %741 = vmatpush1.msra.mxu0 0.0
        %742 = vmatprep.subr.mxu0 0.0
        %743 = vmatpush1.msra.mxu0 0.0
        %744 = vmatprep.subr.mxu0 0.0
        %745 = vmatpush1.msra.mxu0 0.0
        %746 = vmatprep.subr.mxu0 0.0
        %747 = vmatpush1.msra.mxu0 0.0
        %748 = vmatprep.subr.mxu0 0.0
        %749 = vmatpush1.msra.mxu0 0.0
        %750 = vmatprep.subr.mxu0 0.0
        %751 = vmatpush1.msra.mxu0 0.0
        %752 = vmatprep.mubr.f32.mxu0 0.0
        %753 = vmatmul.mubr.f32.gmra.mrb[0].mxu0 %v686
        %v754 = vpop.f32.mrb[0].mxu0
        %v755 = vadd.f32 0.0, %v754
        %v756 = vpop.f32.mrb[0].mxu0
        %757 = vdwg.mxu0
        %758 = vrot.lane.b32.xlu0 %v261, 104
        %v759 = vpop.permute.xlu0 %758
        %760 = vrot.lane.b32.xlu0 %v258, 72
        %v761 = vpop.permute.xlu0 %760
        %v762 = vsel %vm265, %v759, 0
        %v764 = vsel %vm265, %v761, 0
        %766 = vmatprep.subr.mxu0 0.0
        %767 = vmatpush1.xpose.msra.mxu0 %v764
        %768 = vmatprep.subr.mxu0 0.0
        %769 = vmatpush1.xpose.msra.mxu0 0.0
        %770 = vmatprep.subr.mxu0 0.0
        %771 = vmatpush1.xpose.msra.mxu0 0.0
        %772 = vmatprep.subr.mxu0 0.0
        %773 = vmatpush1.xpose.msra.mxu0 0.0
        %774 = vmatprep.subr.mxu0 0.0
        %775 = vmatpush1.xpose.msra.mxu0 0.0
        %776 = vmatprep.subr.mxu0 0.0
        %777 = vmatpush1.xpose.msra.mxu0 0.0
        %778 = vmatprep.subr.mxu0 0.0
        %779 = vmatpush1.xpose.msra.mxu0 0.0
        %780 = vmatprep.subr.mxu0 0.0
        %781 = vmatpush1.xpose.msra.mxu0 0.0
        %782 = vmatprep.subr.mxu0 0.0
        %783 = vmatpush1.xpose.msra.mxu0 0.0
        %784 = vmatprep.subr.mxu0 0.0
        %785 = vmatpush1.xpose.msra.mxu0 0.0
        %786 = vmatprep.subr.mxu0 0.0
        %787 = vmatpush1.xpose.msra.mxu0 0.0
        %788 = vmatprep.subr.mxu0 0.0
        %789 = vmatpush1.xpose.msra.mxu0 0.0
        %790 = vmatprep.subr.mxu0 0.0
        %791 = vmatpush1.xpose.msra.mxu0 0.0
        %792 = vmatprep.subr.mxu0 0.0
        %793 = vmatpush1.xpose.msra.mxu0 0.0
        %794 = vmatprep.subr.mxu0 0.0
        %795 = vmatpush1.xpose.msra.mxu0 0.0
        %796 = vmatprep.subr.mxu0 0.0
        %797 = vmatpush1.xpose.msra.mxu0 0.0
        %798 = vmatprep.subr.mxu0 0.0
        %799 = vmatpush1.xpose.msra.mxu0 0.0
        %800 = vmatprep.subr.mxu0 0.0
        %801 = vmatpush1.xpose.msra.mxu0 0.0
        %802 = vmatprep.subr.mxu0 0.0
        %803 = vmatpush1.xpose.msra.mxu0 0.0
        %804 = vmatprep.subr.mxu0 0.0
        %805 = vmatpush1.xpose.msra.mxu0 0.0
        %806 = vmatprep.subr.mxu0 0.0
        %807 = vmatpush1.xpose.msra.mxu0 0.0
        %808 = vmatprep.subr.mxu0 0.0
        %809 = vmatpush1.xpose.msra.mxu0 0.0
        %810 = vmatprep.subr.mxu0 0.0
        %811 = vmatpush1.xpose.msra.mxu0 0.0
        %812 = vmatprep.subr.mxu0 0.0
        %813 = vmatpush1.xpose.msra.mxu0 0.0
        %814 = vmatprep.subr.mxu0 0.0
        %815 = vmatpush1.xpose.msra.mxu0 0.0
        %816 = vmatprep.subr.mxu0 0.0
        %817 = vmatpush1.xpose.msra.mxu0 0.0
        %818 = vmatprep.subr.mxu0 0.0
        %819 = vmatpush1.xpose.msra.mxu0 0.0
        %820 = vmatprep.subr.mxu0 0.0
        %821 = vmatpush1.xpose.msra.mxu0 0.0
        %822 = vmatprep.subr.mxu0 0.0
        %823 = vmatpush1.xpose.msra.mxu0 0.0
        %824 = vmatprep.subr.mxu0 0.0
        %825 = vmatpush1.xpose.msra.mxu0 0.0
        %826 = vmatprep.subr.mxu0 0.0
        %827 = vmatpush1.xpose.msra.mxu0 0.0
        %828 = vmatprep.subr.mxu0 0.0
        %829 = vmatpush1.xpose.msra.mxu0 0.0
        %830 = vmatprep.mubr.f32.mxu0 0.0
        %831 = vmatmul.mubr.f32.gmra.mrb[0].mxu0 %v762
        %v832 = vpop.f32.mrb[0].mxu0
        %v833 = vadd.f32 0.0, %v832
        %v834 = vpop.f32.mrb[0].mxu0
        %835 = vdwg.mxu0
        %v836 = vsel %vm265, %v833, -inf
        %837 = vmax.xlane.f32.xlu0 %v836
        %v838 = vpop.xlane.xlu0 %837
        %v839 = vsub.f32 %v833, %v838
        %v840 = vmul.f32 %v839, 1.442695
        %v841 = vpow.pop %v840
        %v842 = vsel %vm265, %v841, 0.0
        %843 = vadd.xlane.f32.xlu0 %v842
        %v844 = vpop.xlane.xlu0 %843
        %v845 = vrcp.pop %v844
        %v846 = vmul.f32 %v841, %v845
        %847 = vrot.lane.b32.xlu0 %v258, 40
        %v848 = vpop.permute.xlu0 %847
        %v851 = vsel %vm265, %v846, 0
        %853 = vmatprep.subr.mxu0 0.0
        %854 = vmatpush1.msra.mxu0 %v848
        %855 = vmatprep.subr.mxu0 0.0
        %856 = vmatpush1.msra.mxu0 0.0
        %857 = vmatprep.subr.mxu0 0.0
        %858 = vmatpush1.msra.mxu0 0.0
        %859 = vmatprep.subr.mxu0 0.0
        %860 = vmatpush1.msra.mxu0 0.0
        %861 = vmatprep.subr.mxu0 0.0
        %862 = vmatpush1.msra.mxu0 0.0
        %863 = vmatprep.subr.mxu0 0.0
        %864 = vmatpush1.msra.mxu0 0.0
        %865 = vmatprep.subr.mxu0 0.0
        %866 = vmatpush1.msra.mxu0 0.0
        %867 = vmatprep.subr.mxu0 0.0
        %868 = vmatpush1.msra.mxu0 0.0
        %869 = vmatprep.subr.mxu0 0.0
        %870 = vmatpush1.msra.mxu0 0.0
        %871 = vmatprep.subr.mxu0 0.0
        %872 = vmatpush1.msra.mxu0 0.0
        %873 = vmatprep.subr.mxu0 0.0
        %874 = vmatpush1.msra.mxu0 0.0
        %875 = vmatprep.subr.mxu0 0.0
        %876 = vmatpush1.msra.mxu0 0.0
        %877 = vmatprep.subr.mxu0 0.0
        %878 = vmatpush1.msra.mxu0 0.0
        %879 = vmatprep.subr.mxu0 0.0
        %880 = vmatpush1.msra.mxu0 0.0
        %881 = vmatprep.subr.mxu0 0.0
        %882 = vmatpush1.msra.mxu0 0.0
        %883 = vmatprep.subr.mxu0 0.0
        %884 = vmatpush1.msra.mxu0 0.0
        %885 = vmatprep.subr.mxu0 0.0
        %886 = vmatpush1.msra.mxu0 0.0
        %887 = vmatprep.subr.mxu0 0.0
        %888 = vmatpush1.msra.mxu0 0.0
        %889 = vmatprep.subr.mxu0 0.0
        %890 = vmatpush1.msra.mxu0 0.0
        %891 = vmatprep.subr.mxu0 0.0
        %892 = vmatpush1.msra.mxu0 0.0
        %893 = vmatprep.subr.mxu0 0.0
        %894 = vmatpush1.msra.mxu0 0.0
        %895 = vmatprep.subr.mxu0 0.0
        %896 = vmatpush1.msra.mxu0 0.0
        %897 = vmatprep.subr.mxu0 0.0
        %898 = vmatpush1.msra.mxu0 0.0
        %899 = vmatprep.subr.mxu0 0.0
        %900 = vmatpush1.msra.mxu0 0.0
        %901 = vmatprep.subr.mxu0 0.0
        %902 = vmatpush1.msra.mxu0 0.0
        %903 = vmatprep.subr.mxu0 0.0
        %904 = vmatpush1.msra.mxu0 0.0
        %905 = vmatprep.subr.mxu0 0.0
        %906 = vmatpush1.msra.mxu0 0.0
        %907 = vmatprep.subr.mxu0 0.0
        %908 = vmatpush1.msra.mxu0 0.0
        %909 = vmatprep.subr.mxu0 0.0
        %910 = vmatpush1.msra.mxu0 0.0
        %911 = vmatprep.subr.mxu0 0.0
        %912 = vmatpush1.msra.mxu0 0.0
        %913 = vmatprep.subr.mxu0 0.0
        %914 = vmatpush1.msra.mxu0 0.0
        %915 = vmatprep.subr.mxu0 0.0
        %916 = vmatpush1.msra.mxu0 0.0
        %917 = vmatprep.mubr.f32.mxu0 0.0
        %918 = vmatmul.mubr.f32.gmra.mrb[0].mxu0 %v851
        %v919 = vpop.f32.mrb[0].mxu0
        %v920 = vadd.f32 0.0, %v919
        %v921 = vpop.f32.mrb[0].mxu0
        %922 = vdwg.mxu0
        %924 = vrot.lane.b32.xlu0 %v590, 8
        %v925 = vpop.permute.xlu0 %924
        %928 = vrot.lane.b32.xlu0 %v755, 16
        %v929 = vpop.permute.xlu0 %928
        %932 = vrot.lane.b32.xlu0 %v920, 24
        %v933 = vpop.permute.xlu0 %932
        %v935 = vsel %vm265, %v425, %v925
        %vm936 = vcmask 130048
        %v937 = vsel %vm936, %v935, %v929
        %vm938 = vcmask 195584
        %v939 = vsel %vm938, %v937, %v933
        %v940 = vlaneseq
        %v941 = vshrl.u32 %v940, 7
        %v942 = vsub.s32 0, %v941
        %v943 = vrot.slane %v176, %v942
        %v945 = vsel %vm187, %v939, 0
        %947 = vmatprep.subr.mxu0 0.0
        %948 = vmatpush1.msra.mxu0 %v159
        %949 = vmatprep.subr.mxu0 0.0
        %950 = vmatpush1.msra.mxu0 %v160
        %951 = vmatprep.subr.mxu0 0.0
        %952 = vmatpush1.msra.mxu0 %v161
        %953 = vmatprep.subr.mxu0 0.0
        %954 = vmatpush1.msra.mxu0 %v162
        %955 = vmatprep.subr.mxu0 0.0
        %956 = vmatpush1.msra.mxu0 0.0
        %957 = vmatprep.subr.mxu0 0.0
        %958 = vmatpush1.msra.mxu0 0.0
        %959 = vmatprep.subr.mxu0 0.0
        %960 = vmatpush1.msra.mxu0 0.0
        %961 = vmatprep.subr.mxu0 0.0
        %962 = vmatpush1.msra.mxu0 0.0
        %963 = vmatprep.subr.mxu0 0.0
        %964 = vmatpush1.msra.mxu0 0.0
        %965 = vmatprep.subr.mxu0 0.0
        %966 = vmatpush1.msra.mxu0 0.0
        %967 = vmatprep.subr.mxu0 0.0
        %968 = vmatpush1.msra.mxu0 0.0
        %969 = vmatprep.subr.mxu0 0.0
        %970 = vmatpush1.msra.mxu0 0.0
        %971 = vmatprep.subr.mxu0 0.0
        %972 = vmatpush1.msra.mxu0 0.0
        %973 = vmatprep.subr.mxu0 0.0
        %974 = vmatpush1.msra.mxu0 0.0
        %975 = vmatprep.subr.mxu0 0.0
        %976 = vmatpush1.msra.mxu0 0.0
        %977 = vmatprep.subr.mxu0 0.0
        %978 = vmatpush1.msra.mxu0 0.0
        %979 = vmatprep.subr.mxu0 0.0
        %980 = vmatpush1.msra.mxu0 0.0
        %981 = vmatprep.subr.mxu0 0.0
        %982 = vmatpush1.msra.mxu0 0.0
        %983 = vmatprep.subr.mxu0 0.0
        %984 = vmatpush1.msra.mxu0 0.0
        %985 = vmatprep.subr.mxu0 0.0
        %986 = vmatpush1.msra.mxu0 0.0
        %987 = vmatprep.subr.mxu0 0.0
        %988 = vmatpush1.msra.mxu0 0.0
        %989 = vmatprep.subr.mxu0 0.0
        %990 = vmatpush1.msra.mxu0 0.0
        %991 = vmatprep.subr.mxu0 0.0
        %992 = vmatpush1.msra.mxu0 0.0
        %993 = vmatprep.subr.mxu0 0.0
        %994 = vmatpush1.msra.mxu0 0.0
        %995 = vmatprep.subr.mxu0 0.0
        %996 = vmatpush1.msra.mxu0 0.0
        %997 = vmatprep.subr.mxu0 0.0
        %998 = vmatpush1.msra.mxu0 0.0
        %999 = vmatprep.subr.mxu0 0.0
        %1000 = vmatpush1.msra.mxu0 0.0
        %1001 = vmatprep.subr.mxu0 0.0
        %1002 = vmatpush1.msra.mxu0 0.0
        %1003 = vmatprep.subr.mxu0 0.0
        %1004 = vmatpush1.msra.mxu0 0.0
        %1005 = vmatprep.subr.mxu0 0.0
        %1006 = vmatpush1.msra.mxu0 0.0
        %1007 = vmatprep.subr.mxu0 0.0
        %1008 = vmatpush1.msra.mxu0 0.0
        %1009 = vmatprep.subr.mxu0 0.0
        %1010 = vmatpush1.msra.mxu0 0.0
        %1011 = vmatprep.mubr.f32.mxu0 0.0
        %1012 = vmatmul.mubr.f32.gmra.mrb[0].mxu0 %v945
        %v1013 = vpop.f32.mrb[0].mxu0
        %v1014 = vadd.f32 %v943, %v1013
        %v1015 = vpop.f32.mrb[0].mxu0
        %1016 = vdwg.mxu0
        %v1017 = vadd.f32 %v1014, %v154
        %v1018 = vsel %vm187, %v1017, 0.0
        %1019 = vadd.xlane.f32.xlu0 %v1018
        %v1020 = vpop.xlane.xlu0 %1019
        %v1021 = vrcp.pop 32.0
        %v1022 = vmul.f32 %v1020, %v1021
        %v1023 = vsub.f32 %v1017, %v1022
        %v1024 = vmul.f32 %v1023, %v1023
        %v1025 = vsel %vm187, %v1024, 0.0
        %1026 = vadd.xlane.f32.xlu0 %v1025
        %v1027 = vpop.xlane.xlu0 %1026
        %v1028 = vmul.f32 %v1027, %v1021
        %v1029 = vadd.f32 %v1028, 1e-05
        %v1030 = vrsqrt.pop %v1029
        %v1031 = vmul.f32 %v1023, %v1030
        %v1032 = vlaneseq
        %v1033 = vshrl.u32 %v1032, 7
        %v1034 = vsub.s32 0, %v1033
        %v1035 = vrot.slane %v177, %v1034
        %v1036 = vmul.f32 %v1031, %v1035
        %v1037 = vlaneseq
        %v1038 = vshrl.u32 %v1037, 7
        %v1039 = vsub.s32 0, %v1038
        %v1040 = vrot.slane %v178, %v1039
        %v1041 = vadd.f32 %v1036, %v1040
        %v1042 = vlaneseq
        %v1043 = vshrl.u32 %v1042, 7
        %v1044 = vsub.s32 0, %v1043
        %v1045 = vrot.slane %v179, %v1044
        %v1047 = vsel %vm187, %v1041, 0
        %1049 = vmatprep.subr.mxu0 0.0
        %1050 = vmatpush1.msra.mxu0 %v163
        %1051 = vmatprep.subr.mxu0 0.0
        %1052 = vmatpush1.msra.mxu0 %v164
        %1053 = vmatprep.subr.mxu0 0.0
        %1054 = vmatpush1.msra.mxu0 %v165
        %1055 = vmatprep.subr.mxu0 0.0
        %1056 = vmatpush1.msra.mxu0 %v166
        %1057 = vmatprep.subr.mxu0 0.0
        %1058 = vmatpush1.msra.mxu0 0.0
        %1059 = vmatprep.subr.mxu0 0.0
        %1060 = vmatpush1.msra.mxu0 0.0
        %1061 = vmatprep.subr.mxu0 0.0
        %1062 = vmatpush1.msra.mxu0 0.0
        %1063 = vmatprep.subr.mxu0 0.0
        %1064 = vmatpush1.msra.mxu0 0.0
        %1065 = vmatprep.subr.mxu0 0.0
        %1066 = vmatpush1.msra.mxu0 0.0
        %1067 = vmatprep.subr.mxu0 0.0
        %1068 = vmatpush1.msra.mxu0 0.0
        %1069 = vmatprep.subr.mxu0 0.0
        %1070 = vmatpush1.msra.mxu0 0.0
        %1071 = vmatprep.subr.mxu0 0.0
        %1072 = vmatpush1.msra.mxu0 0.0
        %1073 = vmatprep.subr.mxu0 0.0
        %1074 = vmatpush1.msra.mxu0 0.0
        %1075 = vmatprep.subr.mxu0 0.0
        %1076 = vmatpush1.msra.mxu0 0.0
        %1077 = vmatprep.subr.mxu0 0.0
        %1078 = vmatpush1.msra.mxu0 0.0
        %1079 = vmatprep.subr.mxu0 0.0
        %1080 = vmatpush1.msra.mxu0 0.0
        %1081 = vmatprep.subr.mxu0 0.0
        %1082 = vmatpush1.msra.mxu0 0.0
        %1083 = vmatprep.subr.mxu0 0.0
        %1084 = vmatpush1.msra.mxu0 0.0
        %1085 = vmatprep.subr.mxu0 0.0
        %1086 = vmatpush1.msra.mxu0 0.0
        %1087 = vmatprep.subr.mxu0 0.0
        %1088 = vmatpush1.msra.mxu0 0.0
        %1089 = vmatprep.subr.mxu0 0.0
        %1090 = vmatpush1.msra.mxu0 0.0
        %1091 = vmatprep.subr.mxu0 0.0
        %1092 = vmatpush1.msra.mxu0 0.0
        %1093 = vmatprep.subr.mxu0 0.0
        %1094 = vmatpush1.msra.mxu0 0.0
        %1095 = vmatprep.subr.mxu0 0.0
        %1096 = vmatpush1.msra.mxu0 0.0
        %1097 = vmatprep.subr.mxu0 0.0
        %1098 = vmatpush1.msra.mxu0 0.0
        %1099 = vmatprep.subr.mxu0 0.0
        %1100 = vmatpush1.msra.mxu0 0.0
        %1101 = vmatprep.subr.mxu0 0.0
        %1102 = vmatpush1.msra.mxu0 0.0
        %1103 = vmatprep.subr.mxu0 0.0
        %1104 = vmatpush1.msra.mxu0 0.0
        %1105 = vmatprep.subr.mxu0 0.0
        %1106 = vmatpush1.msra.mxu0 0.0
        %1107 = vmatprep.subr.mxu0 0.0
        %1108 = vmatpush1.msra.mxu0 0.0
        %1109 = vmatprep.subr.mxu0 0.0
        %1110 = vmatpush1.msra.mxu0 0.0
        %1111 = vmatprep.subr.mxu0 0.0
        %1112 = vmatpush1.msra.mxu0 0.0
        %1113 = vmatprep.mubr.f32.mxu0 0.0
        %1114 = vmatmul.mubr.f32.gmra.mrb[0].mxu0 %v1047
        %v1115 = vpop.f32.mrb[0].mxu0
        %v1116 = vadd.f32 %v1045, %v1115
        %v1117 = vpop.f32.mrb[0].mxu0
        %1118 = vdwg.mxu0
        %v1119 = vmul.f32 %v1116, 0.5
        %v1120 = vmul.f32 %v1116, 0.70710677
        %v1121 = verf.f32.pop %v1120
        %v1122 = vadd.f32 %v1121, 1.0
        %v1123 = vmul.f32 %v1119, %v1122
        %v1124 = vlaneseq
        %v1125 = vshrl.u32 %v1124, 7
        %v1126 = vsub.s32 0, %v1125
        %v1127 = vrot.slane %v180, %v1126
        %vm1128 = vcmask 523264
        %v1130 = vsel %vm1128, %v1123, 0
        %1132 = vmatprep.subr.mxu0 0.0
        %1133 = vmatpush1.msra.mxu0 %v167
        %1134 = vmatprep.subr.mxu0 0.0
        %1135 = vmatpush1.msra.mxu0 %v168
        %1136 = vmatprep.subr.mxu0 0.0
        %1137 = vmatpush1.msra.mxu0 %v169
        %1138 = vmatprep.subr.mxu0 0.0
        %1139 = vmatpush1.msra.mxu0 %v170
        %1140 = vmatprep.subr.mxu0 0.0
        %1141 = vmatpush1.msra.mxu0 %v171
        %1142 = vmatprep.subr.mxu0 0.0
        %1143 = vmatpush1.msra.mxu0 %v172
        %1144 = vmatprep.subr.mxu0 0.0
        %1145 = vmatpush1.msra.mxu0 %v173
        %1146 = vmatprep.subr.mxu0 0.0
        %1147 = vmatpush1.msra.mxu0 %v174
        %1148 = vmatprep.subr.mxu0 0.0
        %1149 = vmatpush1.msra.mxu0 0.0
        %1150 = vmatprep.subr.mxu0 0.0
        %1151 = vmatpush1.msra.mxu0 0.0
        %1152 = vmatprep.subr.mxu0 0.0
        %1153 = vmatpush1.msra.mxu0 0.0
        %1154 = vmatprep.subr.mxu0 0.0
        %1155 = vmatpush1.msra.mxu0 0.0
        %1156 = vmatprep.subr.mxu0 0.0
        %1157 = vmatpush1.msra.mxu0 0.0
        %1158 = vmatprep.subr.mxu0 0.0
        %1159 = vmatpush1.msra.mxu0 0.0
        %1160 = vmatprep.subr.mxu0 0.0
        %1161 = vmatpush1.msra.mxu0 0.0
        %1162 = vmatprep.subr.mxu0 0.0
        %1163 = vmatpush1.msra.mxu0 0.0
        %1164 = vmatprep.subr.mxu0 0.0
        %1165 = vmatpush1.msra.mxu0 0.0
        %1166 = vmatprep.subr.mxu0 0.0
        %1167 = vmatpush1.msra.mxu0 0.0
        %1168 = vmatprep.subr.mxu0 0.0
        %1169 = vmatpush1.msra.mxu0 0.0
        %1170 = vmatprep.subr.mxu0 0.0
        %1171 = vmatpush1.msra.mxu0 0.0
        %1172 = vmatprep.subr.mxu0 0.0
        %1173 = vmatpush1.msra.mxu0 0.0
        %1174 = vmatprep.subr.mxu0 0.0
        %1175 = vmatpush1.msra.mxu0 0.0
        %1176 = vmatprep.subr.mxu0 0.0
        %1177 = vmatpush1.msra.mxu0 0.0
        %1178 = vmatprep.subr.mxu0 0.0
        %1179 = vmatpush1.msra.mxu0 0.0
        %1180 = vmatprep.subr.mxu0 0.0
        %1181 = vmatpush1.msra.mxu0 0.0
        %1182 = vmatprep.subr.mxu0 0.0
        %1183 = vmatpush1.msra.mxu0 0.0
        %1184 = vmatprep.subr.mxu0 0.0
        %1185 = vmatpush1.msra.mxu0 0.0
        %1186 = vmatprep.subr.mxu0 0.0
        %1187 = vmatpush1.msra.mxu0 0.0
        %1188 = vmatprep.subr.mxu0 0.0
        %1189 = vmatpush1.msra.mxu0 0.0
        %1190 = vmatprep.subr.mxu0 0.0
        %1191 = vmatpush1.msra.mxu0 0.0
        %1192 = vmatprep.subr.mxu0 0.0
        %1193 = vmatpush1.msra.mxu0 0.0
        %1194 = vmatprep.subr.mxu0 0.0
        %1195 = vmatpush1.msra.mxu0 0.0
        %1196 = vmatprep.mubr.f32.mxu0 0.0
        %1197 = vmatmul.mubr.f32.gmra.mrb[0].mxu0 %v1130
        %v1198 = vpop.f32.mrb[0].mxu0
        %v1199 = vadd.f32 %v1127, %v1198
        %v1200 = vpop.f32.mrb[0].mxu0
        %1201 = vdwg.mxu0
        %v1202 = vadd.f32 %v1199, %v1041
        %v1203 = vsel %vm187, %v1202, 0.0
        %1204 = vadd.xlane.f32.xlu0 %v1203
        %v1205 = vpop.xlane.xlu0 %1204
        %v1206 = vmul.f32 %v1205, %v1021
        %v1207 = vsub.f32 %v1202, %v1206
        %v1208 = vmul.f32 %v1207, %v1207
        %v1209 = vsel %vm187, %v1208, 0.0
        %1210 = vadd.xlane.f32.xlu0 %v1209
        %v1211 = vpop.xlane.xlu0 %1210
        %v1212 = vmul.f32 %v1211, %v1021
        %v1213 = vadd.f32 %v1212, 1e-05
        %v1214 = vrsqrt.pop %v1213
        %v1215 = vmul.f32 %v1207, %v1214
        %v1216 = vlaneseq
        %v1217 = vshrl.u32 %v1216, 7
        %v1218 = vsub.s32 0, %v1217
        %v1219 = vrot.slane %v181, %v1218
        %v1220 = vmul.f32 %v1215, %v1219
        %v1221 = vlaneseq
        %v1222 = vshrl.u32 %v1221, 7
        %v1223 = vsub.s32 0, %v1222
        %v1224 = vrot.slane %v182, %v1223
        %v1225 = vadd.f32 %v1220, %v1224
        %1226 = vst.msk [vmem:[%s153] sm:$0xff] %vm187, %v1225
        %p1227 = scmp.lt.s32.totalorder %s14, 1
        %s1228 = scalar_select %p1227, %s14, 1
        %s1229 = smul.addr %s1228, 8
        %s1230 = scalar_lea.vmem %s2, %s1229
        // Predicated region
        $region33: #{transformer_block.1} parent=27 // pred_check
          %p1231 = pneg %p79
        $region34: #{transformer_block.1} parent=27 // pred_check_branch
          %1233 = sbr.rel (%p1231) target = $region36
        $region35: #{transformer_block.1} parent=27 // pred_region
          _
        $region36: #{transformer_block.1} parent=27 // pred_fallthru
          _
      $region28: #{transformer_block.1} parent=5 // pred_fallthru
        _
      %p1234 = scmp.le.s32.totalorder 2, %s9
      // Predicated region
      $region37: #{transformer_block.1} parent=5 // pred_check
        %p1235 = pneg %p1234
      $region38: #{transformer_block.1} parent=5 // pred_check_branch
        %1237 = sbr.rel (%p1235) target = $region40
      $region39: #{transformer_block.1} parent=5 // pred_region
        %s1238 = ssub.s32 %s9, 2
        // Predicated region
        $region41: #{transformer_block.1} parent=39 // pred_check
          %p1239 = pneg %p85
        $region42: #{transformer_block.1} parent=39 // pred_check_branch
          %1241 = sbr.rel (%p1239) target = $region44
        $region43: #{transformer_block.1} parent=39 // pred_region
          %p1242 = scmp.lt.s32.totalorder %s15, 1
          %s1243 = scalar_select %p1242, %s15, 1
          %s1244 = smul.addr %s1243, 8
          %s1245 = scalar_lea.vmem %s2, %s1244
        $region44: #{transformer_block.1} parent=39 // pred_fallthru
          _
      $region40: #{transformer_block.1} parent=5 // pred_fallthru
        _
    $region6: #{transformer_block.1} parent=1 // loop_footer
      %s13 = sadd.s32 1, %s9
    $region7: #{transformer_block.1} parent=1 // loop_footer_branch
      %8 = sbr.rel target = $region3
    $region8: #{transformer_block.1} parent=1 // loop_exit
      _
    %1246 = vsyncpa [#allocation3], 1
    %s1247 = scalar_lea.sflag [#allocation3], 1
    %1248 = vsyncpa %s1247, 1

</llo_original>
